<compile_context>
chip_gen: v6e
topology: v6e:2x2x1
jax: 0.10.0
libtpu: 0.0.40
codegen_flags: <defaults>
</compile_context>

<pallas_src>
import math

import jax
import jax.numpy as jnp
from jax.experimental import pallas as pl
from jax.experimental.pallas import tpu as pltpu

_LOG2PI = math.log(2.0 * math.pi)
_LANE = 128
_BATCH_ALIGN = 16  # works for both f32 (8) and bf16 (16) sublane tiling


def _round_up(x, m):
    return ((x + m - 1) // m) * m


def _elu(x):
    # torch.nn.ELU(alpha=1.0); min() guards exp overflow on the untaken branch.
    return jnp.where(x > 0, x, jnp.exp(jnp.minimum(x, 0.0)) - 1.0)


def _pad2d(a, rows, cols, dtype):
    a = jnp.asarray(a, dtype)
    return jnp.pad(a, ((0, rows - a.shape[0]), (0, cols - a.shape[1])))


def _vmem_per_core_bytes():
    """Per-TensorCore VMEM capacity; clamp v7x-style (2 TC) chips to 64 MiB/TC."""
    cap = 128 << 20
    try:
        info = pltpu.get_tpu_info()
        cap = int(info.vmem_capacity_bytes)
        name = ""
        for attr in ("chip_version", "chip", "version", "name"):
            v = getattr(info, attr, None)
            if v is not None:
                name = str(v)
                break
        if "7" in name:          # conservative: only ever lowers the budget
            cap = min(cap, 64 << 20)
    except Exception:
        pass
    return cap


# ----------------------------------------------------------------------------
# Kernel
# ----------------------------------------------------------------------------
def make_actor_critic_kernel(n_actor, n_critic, a_pad, batch_tile):
    def kernel(*refs):
        idx = 0
        obs_ref = refs[idx]; idx += 1
        st_ref = refs[idx]; idx += 1
        actor = [(refs[idx + 2 * i], refs[idx + 2 * i + 1]) for i in range(n_actor)]
        idx += 2 * n_actor
        critic = [(refs[idx + 2 * i], refs[idx + 2 * i + 1]) for i in range(n_critic)]
        idx += 2 * n_critic
        mw_ref, mb_ref = refs[idx], refs[idx + 1]; idx += 2
        vw_ref, vb_ref = refs[idx], refs[idx + 1]; idx += 2
        out_ref = refs[idx]

        # ---- actor tower first: bf16 activations, f32 MXU accumulation ----
        x = obs_ref[...]
        for w_ref, b_ref in actor:
            x = _elu(jnp.dot(x, w_ref[...], preferred_element_type=jnp.float32)
                     + b_ref[...]).astype(jnp.bfloat16)
        mu = jnp.dot(x, mw_ref[...], preferred_element_type=jnp.float32) + mb_ref[...]
        # Store mu now -> actor activations dead before critic ones are live.
        out_ref[:, 0:a_pad] = mu

        # ---- critic tower ----
        s = st_ref[...]
        for w_ref, b_ref in critic:
            s = _elu(jnp.dot(s, w_ref[...], preferred_element_type=jnp.float32)
                     + b_ref[...]).astype(jnp.bfloat16)
        # N=1 value head -> VPU multiply + lane reduce (no MXU push/pop).
        value = (jnp.sum(s.astype(jnp.float32) * vw_ref[...], axis=-1, keepdims=True)
                 + vb_ref[...])
        lane = jax.lax.broadcasted_iota(jnp.int32, (batch_tile, _LANE), 1)
        out_ref[:, a_pad:a_pad + _LANE] = jnp.where(lane == 0, value, 0.0)

    return kernel


# ----------------------------------------------------------------------------
# Wrapper
# ----------------------------------------------------------------------------
def actor_critic_forward(params, obs, states, prev_actions, batch_tile=256):
    """Fused forward pass. Returns dict matching ActorCritic.forward()."""
    B, obs_dim = obs.shape
    state_dim = states.shape[1]
    A = prev_actions.shape[1]
    n_actor = len(params["actor"])
    n_critic = len(params["critic"])

    vmem_cap = _vmem_per_core_bytes()

    b_aligned = _round_up(B, _BATCH_ALIGN)
    tb = _round_up(min(batch_tile, b_aligned), _BATCH_ALIGN)
    # Prefer >=2 grid tiles so a 2-TensorCore chip (v7x) can split the batch.
    if b_aligned >= 2 * _BATCH_ALIGN and b_aligned // tb < 2:
        tb = _round_up((b_aligned + 1) // 2, _BATCH_ALIGN)
    b_pad = _round_up(B, tb)
    n_tiles = b_pad // tb

    obs_pad = _round_up(obs_dim, _LANE)
    st_pad = _round_up(state_dim, _LANE)
    a_pad = _round_up(A, _LANE)

    # ---- padded, bf16-cast streamed inputs (zero padding keeps math exact) ----
    obs_p = _pad2d(obs, b_pad, obs_pad, jnp.bfloat16)
    st_p = _pad2d(states, b_pad, st_pad, jnp.bfloat16)

    flat = [obs_p, st_p]
    stream_specs = [
        pl.BlockSpec((tb, obs_pad), lambda i: (i, 0)),
        pl.BlockSpec((tb, st_pad), lambda i: (i, 0)),
    ]
    const_shapes = []   # weights/biases: VMEM-resident across grid steps
    layer_dims = []

    def add_layer(w, b, k_pad):
        n_pad = _round_up(w.shape[1], _LANE)
        flat.append(_pad2d(w, k_pad, n_pad, jnp.bfloat16))
        flat.append(_pad2d(jnp.reshape(b, (1, -1)), 1, n_pad, jnp.float32))
        const_shapes.append((k_pad, n_pad))
        const_shapes.append((1, n_pad))
        layer_dims.append((k_pad, n_pad))
        return n_pad

    k = obs_pad
    for (w, b) in params["actor"]:
        k = add_layer(w, b, k)
    ha_pad = k
    k = st_pad
    for (w, b) in params["critic"]:
        k = add_layer(w, b, k)
    hc_pad = k

    # mu head (bf16) + bias
    flat.append(_pad2d(params["mu_w"], ha_pad, a_pad, jnp.bfloat16))
    flat.append(_pad2d(jnp.reshape(params["mu_b"], (1, -1)), 1, a_pad, jnp.float32))
    const_shapes += [(ha_pad, a_pad), (1, a_pad)]
    # value head as a (1, Hc_pad) f32 row (VPU reduce in-kernel) + (1,1) bias
    flat.append(_pad2d(jnp.reshape(params["value_w"], (-1, 1)).T, 1, hc_pad, jnp.float32))
    flat.append(jnp.reshape(params["value_b"], (1, 1)).astype(jnp.float32))
    const_shapes += [(1, hc_pad), (1, 1)]

    # ---- lean output slab: [mu (a_pad) | value at lane 0 of a 128-lane block] ----
    p_out = a_pad + _LANE
    out_shape = jax.ShapeDtypeStruct((b_pad, p_out), jnp.float32)
    out_spec = pl.BlockSpec((tb, p_out), lambda i: (i, 0))

    # ---- cost estimate + VMEM budget ----
    mm_flops = 2 * b_pad * (sum(kp * np_ for kp, np_ in layer_dims) + ha_pad * a_pad)
    flops = mm_flops + 2 * b_pad * hc_pad
    transcendentals = b_pad * sum(np_ for _, np_ in layer_dims)
    bytes_accessed = (sum(int(x.size) * x.dtype.itemsize for x in flat)
                      + b_pad * p_out * 4)

    weight_bytes = sum(int(x.size) * x.dtype.itemsize for x in flat[2:])
    stream_tile_bytes = 2 * tb * (obs_pad * 2 + st_pad * 2)   # double-buffered streams
    out_tile_bytes = 2 * tb * p_out * 4
    vmem_limit = int(min(
        max(2 * weight_bytes + stream_tile_bytes + out_tile_bytes + (8 << 20),
            32 << 20),
        0.7 * vmem_cap))

    kernel = make_actor_critic_kernel(n_actor, n_critic, a_pad, tb)
    const_map = lambda i: (0, 0)

    def run(single_buffer_consts):
        if single_buffer_consts:
            const_specs = [pl.BlockSpec(s, const_map, pipeline_mode=pl.Buffered(1))
                           for s in const_shapes]
        else:
            const_specs = [pl.BlockSpec(s, const_map) for s in const_shapes]
        return pl.pallas_call(
            kernel,
            out_shape=out_shape,
            grid_spec=pltpu.PrefetchScalarGridSpec(
                num_scalar_prefetch=0,
                grid=(n_tiles,),
                in_specs=stream_specs + const_specs,
                out_specs=out_spec,
            ),
            compiler_params=pltpu.CompilerParams(
                dimension_semantics=("parallel",),
                vmem_limit_bytes=vmem_limit,
            ),
            cost_estimate=pl.CostEstimate(
                flops=int(flops),
                transcendentals=int(transcendentals),
                bytes_accessed=int(bytes_accessed),
            ),
        )(*flat)

    try:
        # Weights never change block index -> single-buffer to halve their VMEM.
        slab = run(True)
    except Exception:
        slab = run(False)   # fallback if this JAX build rejects Buffered(1)

    mus = slab[:B, :A]
    values = slab[:B, a_pad:a_pad + 1]

    # Batch-independent Gaussian stats + tiny (B, A) neglogp epilogue in plain
    # JAX: keeps replicated / 97%-padded data out of the HBM-bound kernel.
    logstd = jnp.reshape(params["sigma"], (1, A)).astype(jnp.float32)
    sigmas = jnp.broadcast_to(jnp.exp(logstd), (B, A))
    entropy = jnp.broadcast_to(
        jnp.sum(0.5 + 0.5 * _LOG2PI + logstd, axis=-1), (B,))
    inv_two_var = 0.5 * jnp.exp(-2.0 * logstd)
    diff = prev_actions.astype(jnp.float32) - mus
    neglogp = (jnp.sum(diff * diff * inv_two_var, axis=-1)
               + jnp.sum(logstd + 0.5 * _LOG2PI, axis=-1))

    return {
        "prev_neglogp": neglogp,
        "values": values,
        "entropy": entropy,
        "mus": mus,
        "sigmas": sigmas,
    }


# ----------------------------------------------------------------------------
# Deterministic parameter construction (mirrors the module's __init__ shapes).
# Linear weights stored as (in_features, out_features); biases zeroed; sigma=0.
# ----------------------------------------------------------------------------
def init_params(key, obs_dim, state_dim, actions_num, actor_units, critic_units):
    def linear(k, fan_in, fan_out):
        bound = 1.0 / math.sqrt(fan_in)
        w = jax.random.uniform(k, (fan_in, fan_out), jnp.float32, -bound, bound)
        b = jnp.zeros((1, fan_out), jnp.float32)
        return w, b

    keys = jax.random.split(key, len(actor_units) + len(critic_units) + 2)
    ki = 0
    actor = []
    in_size = obs_dim
    for out_size in actor_units:
        actor.append(linear(keys[ki], in_size, out_size)); ki += 1
        in_size = out_size
    critic = []
    in_size = state_dim
    for out_size in critic_units:
        critic.append(linear(keys[ki], in_size, out_size)); ki += 1
        in_size = out_size
    value_w, value_b = linear(keys[ki], critic_units[-1], 1); ki += 1
    mu_w, mu_b = linear(keys[ki], actor_units[-1], actions_num); ki += 1
    sigma = jnp.zeros((1, actions_num), jnp.float32)
    return {"actor": actor, "critic": critic,
            "value_w": value_w, "value_b": value_b,
            "mu_w": mu_w, "mu_b": mu_b, "sigma": sigma}


# ----------------------------------------------------------------------------
# Pure-JAX reference mirroring the kernel's numerical recipe (bf16 inter-layer
# activations, f32 accumulation / epilogue) for the correctness check.
# ----------------------------------------------------------------------------
def reference_forward(params, obs, states, prev_actions):
    bf = jnp.bfloat16
    x = obs.astype(bf)
    for w, b in params["actor"]:
        x = _elu(jnp.dot(x, w.astype(bf), preferred_element_type=jnp.float32)
                 + jnp.reshape(b, (1, -1))).astype(bf)
    s = states.astype(bf)
    for w, b in params["critic"]:
        s = _elu(jnp.dot(s, w.astype(bf), preferred_element_type=jnp.float32)
                 + jnp.reshape(b, (1, -1))).astype(bf)
    mu = jnp.dot(x, params["mu_w"].astype(bf), preferred_element_type=jnp.float32) \
        + jnp.reshape(params["mu_b"], (1, -1))
    value = (jnp.sum(s.astype(jnp.float32) * params["value_w"][:, 0][None, :],
                     axis=-1, keepdims=True)
             + jnp.reshape(params["value_b"], (1, 1)))
    logstd = jnp.reshape(params["sigma"], (1, -1))
    sigma = jnp.broadcast_to(jnp.exp(logstd), mu.shape)
    entropy = jnp.broadcast_to(
        jnp.sum(0.5 + 0.5 * _LOG2PI + logstd, axis=-1), (obs.shape[0],))
    logp = (-((prev_actions - mu) ** 2) * (0.5 * jnp.exp(-2.0 * logstd))
            - logstd - 0.5 * _LOG2PI)
    neglogp = -jnp.sum(logp, axis=-1)
    return {"prev_neglogp": neglogp, "values": value,
            "entropy": entropy, "mus": mu, "sigmas": sigma}


if __name__ == "__main__":
    B = 2
    obs_dim, state_dim = 16, 20
    actions_num = 4
    actor_units = [32, 32]
    critic_units = [32, 32]

    key = jax.random.PRNGKey(0)
    pkey, okey, skey, akey = jax.random.split(key, 4)

    params = init_params(pkey, obs_dim, state_dim, actions_num,
                         actor_units, critic_units)
    obs = jax.random.normal(okey, (B, obs_dim), jnp.float32)
    states = jax.random.normal(skey, (B, state_dim), jnp.float32)
    prev_actions = jax.random.normal(akey, (B, actions_num), jnp.float32)

    out = actor_critic_forward(params, obs, states, prev_actions)
    out = jax.block_until_ready(out)

    ref = reference_forward(params, obs, states, prev_actions)
    for k in ("prev_neglogp", "values", "entropy", "mus", "sigmas"):
        assert out[k].shape == ref[k].shape, (k, out[k].shape, ref[k].shape)
        assert jnp.allclose(out[k], ref[k], rtol=1e-2, atol=1e-2), (
            k, out[k], ref[k])

    print("KERNEL_OK")
</pallas_src>

<mosaic_0001>
module attributes {stable_mosaic.version = 11 : i64} {
  func.func @kernel(%arg0: i32, %arg1: memref<16x128xbf16, #tpu.memory_space<vmem>>, %arg2: memref<16x128xbf16, #tpu.memory_space<vmem>>, %arg3: memref<128x128xbf16, #tpu.memory_space<vmem>>, %arg4: memref<1x128xf32, #tpu.memory_space<vmem>>, %arg5: memref<128x128xbf16, #tpu.memory_space<vmem>>, %arg6: memref<1x128xf32, #tpu.memory_space<vmem>>, %arg7: memref<128x128xbf16, #tpu.memory_space<vmem>>, %arg8: memref<1x128xf32, #tpu.memory_space<vmem>>, %arg9: memref<128x128xbf16, #tpu.memory_space<vmem>>, %arg10: memref<1x128xf32, #tpu.memory_space<vmem>>, %arg11: memref<128x128xbf16, #tpu.memory_space<vmem>>, %arg12: memref<1x128xf32, #tpu.memory_space<vmem>>, %arg13: memref<1x128xf32, #tpu.memory_space<vmem>>, %arg14: memref<1x1xf32, #tpu.memory_space<vmem>>, %arg15: memref<16x256xf32, #tpu.memory_space<vmem>>) attributes {dimension_semantics = [#tpu.dimension_semantics<parallel>], iteration_bounds = array<i64: 1>, scalar_prefetch = 0 : i64, scratch_operands = 0 : i64, tpu.core_type = #tpu.core_type<tc>, window_params = [{transform_indices = @transform_0, window_bounds = array<i64: 16, 128>}, {transform_indices = @transform_1, window_bounds = array<i64: 16, 128>}, {pipeline_mode = #tpu.pipeline_mode<synchronous>, transform_indices = @transform_2, window_bounds = array<i64: 128, 128>}, {pipeline_mode = #tpu.pipeline_mode<synchronous>, transform_indices = @transform_3, window_bounds = array<i64: 1, 128>}, {pipeline_mode = #tpu.pipeline_mode<synchronous>, transform_indices = @transform_4, window_bounds = array<i64: 128, 128>}, {pipeline_mode = #tpu.pipeline_mode<synchronous>, transform_indices = @transform_5, window_bounds = array<i64: 1, 128>}, {pipeline_mode = #tpu.pipeline_mode<synchronous>, transform_indices = @transform_6, window_bounds = array<i64: 128, 128>}, {pipeline_mode = #tpu.pipeline_mode<synchronous>, transform_indices = @transform_7, window_bounds = array<i64: 1, 128>}, {pipeline_mode = #tpu.pipeline_mode<synchronous>, transform_indices = @transform_8, window_bounds = array<i64: 128, 128>}, {pipeline_mode = #tpu.pipeline_mode<synchronous>, transform_indices = @transform_9, window_bounds = array<i64: 1, 128>}, {pipeline_mode = #tpu.pipeline_mode<synchronous>, transform_indices = @transform_10, window_bounds = array<i64: 128, 128>}, {pipeline_mode = #tpu.pipeline_mode<synchronous>, transform_indices = @transform_11, window_bounds = array<i64: 1, 128>}, {pipeline_mode = #tpu.pipeline_mode<synchronous>, transform_indices = @transform_12, window_bounds = array<i64: 1, 128>}, {pipeline_mode = #tpu.pipeline_mode<synchronous>, transform_indices = @transform_13, window_bounds = array<i64: 1, 1>}, {transform_indices = @transform_14, window_bounds = array<i64: 16, 256>}]} {
    %c0 = arith.constant 0 : index
    %c0_0 = arith.constant 0 : index
    %0 = vector.load %arg1[%c0, %c0_0] : memref<16x128xbf16, #tpu.memory_space<vmem>>, vector<16x128xbf16>
    %c0_1 = arith.constant 0 : index
    %c0_2 = arith.constant 0 : index
    %1 = vector.load %arg3[%c0_1, %c0_2] : memref<128x128xbf16, #tpu.memory_space<vmem>>, vector<128x128xbf16>
    %cst = arith.constant dense<0.000000e+00> : vector<16x128xf32>
    %2 = tpu.matmul %0, %1, %cst {dimension_numbers = #tpu.dot_dimension_numbers<[1], [0], [0], [1], [0, 0, 1, 1], [], []>} : vector<16x128xbf16>, vector<128x128xbf16>, vector<16x128xf32> -> vector<16x128xf32>
    %c0_3 = arith.constant 0 : index
    %c0_4 = arith.constant 0 : index
    %3 = vector.load %arg4[%c0_3, %c0_4] : memref<1x128xf32, #tpu.memory_space<vmem>>, vector<1x128xf32>
    %4 = vector.broadcast %3 : vector<1x128xf32> to vector<16x128xf32>
    %5 = arith.addf %2, %4 : vector<16x128xf32>
    %cst_5 = arith.constant 0.000000e+00 : f32
    %6 = vector.broadcast %cst_5 : f32 to vector<16x128xf32>
    %7 = arith.cmpf ogt, %5, %6 : vector<16x128xf32>
    %cst_6 = arith.constant 0.000000e+00 : f32
    %8 = vector.broadcast %cst_6 : f32 to vector<16x128xf32>
    %9 = arith.minimumf %5, %8 : vector<16x128xf32>
    %10 = math.exp %9 : vector<16x128xf32>
    %cst_7 = arith.constant 1.000000e+00 : f32
    %11 = vector.broadcast %cst_7 : f32 to vector<16x128xf32>
    %12 = arith.subf %10, %11 : vector<16x128xf32>
    %13 = arith.select %7, %5, %12 : vector<16x128xi1>, vector<16x128xf32>
    %14 = arith.truncf %13 : vector<16x128xf32> to vector<16x128xbf16>
    %c0_8 = arith.constant 0 : index
    %c0_9 = arith.constant 0 : index
    %15 = vector.load %arg5[%c0_8, %c0_9] : memref<128x128xbf16, #tpu.memory_space<vmem>>, vector<128x128xbf16>
    %cst_10 = arith.constant dense<0.000000e+00> : vector<16x128xf32>
    %16 = tpu.matmul %14, %15, %cst_10 {dimension_numbers = #tpu.dot_dimension_numbers<[1], [0], [0], [1], [0, 0, 1, 1], [], []>} : vector<16x128xbf16>, vector<128x128xbf16>, vector<16x128xf32> -> vector<16x128xf32>
    %c0_11 = arith.constant 0 : index
    %c0_12 = arith.constant 0 : index
    %17 = vector.load %arg6[%c0_11, %c0_12] : memref<1x128xf32, #tpu.memory_space<vmem>>, vector<1x128xf32>
    %18 = vector.broadcast %17 : vector<1x128xf32> to vector<16x128xf32>
    %19 = arith.addf %16, %18 : vector<16x128xf32>
    %cst_13 = arith.constant 0.000000e+00 : f32
    %20 = vector.broadcast %cst_13 : f32 to vector<16x128xf32>
    %21 = arith.cmpf ogt, %19, %20 : vector<16x128xf32>
    %cst_14 = arith.constant 0.000000e+00 : f32
    %22 = vector.broadcast %cst_14 : f32 to vector<16x128xf32>
    %23 = arith.minimumf %19, %22 : vector<16x128xf32>
    %24 = math.exp %23 : vector<16x128xf32>
    %cst_15 = arith.constant 1.000000e+00 : f32
    %25 = vector.broadcast %cst_15 : f32 to vector<16x128xf32>
    %26 = arith.subf %24, %25 : vector<16x128xf32>
    %27 = arith.select %21, %19, %26 : vector<16x128xi1>, vector<16x128xf32>
    %28 = arith.truncf %27 : vector<16x128xf32> to vector<16x128xbf16>
    %c0_16 = arith.constant 0 : index
    %c0_17 = arith.constant 0 : index
    %29 = vector.load %arg11[%c0_16, %c0_17] : memref<128x128xbf16, #tpu.memory_space<vmem>>, vector<128x128xbf16>
    %cst_18 = arith.constant dense<0.000000e+00> : vector<16x128xf32>
    %30 = tpu.matmul %28, %29, %cst_18 {dimension_numbers = #tpu.dot_dimension_numbers<[1], [0], [0], [1], [0, 0, 1, 1], [], []>} : vector<16x128xbf16>, vector<128x128xbf16>, vector<16x128xf32> -> vector<16x128xf32>
    %c0_19 = arith.constant 0 : index
    %c0_20 = arith.constant 0 : index
    %31 = vector.load %arg12[%c0_19, %c0_20] : memref<1x128xf32, #tpu.memory_space<vmem>>, vector<1x128xf32>
    %32 = vector.broadcast %31 : vector<1x128xf32> to vector<16x128xf32>
    %33 = arith.addf %30, %32 : vector<16x128xf32>
    %c0_21 = arith.constant 0 : index
    %c0_22 = arith.constant 0 : index
    %34 = vector.load %arg15[%c0_21, %c0_22] : memref<16x256xf32, #tpu.memory_space<vmem>>, vector<16x128xf32>
    tpu.vector_store %arg15[%c0_21, %c0_22], %33 {strides = array<i32>} : memref<16x256xf32, #tpu.memory_space<vmem>>, vector<16x128xf32>,
    %c0_23 = arith.constant 0 : index
    %c0_24 = arith.constant 0 : index
    %35 = vector.load %arg2[%c0_23, %c0_24] : memref<16x128xbf16, #tpu.memory_space<vmem>>, vector<16x128xbf16>
    %c0_25 = arith.constant 0 : index
    %c0_26 = arith.constant 0 : index
    %36 = vector.load %arg7[%c0_25, %c0_26] : memref<128x128xbf16, #tpu.memory_space<vmem>>, vector<128x128xbf16>
    %cst_27 = arith.constant dense<0.000000e+00> : vector<16x128xf32>
    %37 = tpu.matmul %35, %36, %cst_27 {dimension_numbers = #tpu.dot_dimension_numbers<[1], [0], [0], [1], [0, 0, 1, 1], [], []>} : vector<16x128xbf16>, vector<128x128xbf16>, vector<16x128xf32> -> vector<16x128xf32>
    %c0_28 = arith.constant 0 : index
    %c0_29 = arith.constant 0 : index
    %38 = vector.load %arg8[%c0_28, %c0_29] : memref<1x128xf32, #tpu.memory_space<vmem>>, vector<1x128xf32>
    %39 = vector.broadcast %38 : vector<1x128xf32> to vector<16x128xf32>
    %40 = arith.addf %37, %39 : vector<16x128xf32>
    %cst_30 = arith.constant 0.000000e+00 : f32
    %41 = vector.broadcast %cst_30 : f32 to vector<16x128xf32>
    %42 = arith.cmpf ogt, %40, %41 : vector<16x128xf32>
    %cst_31 = arith.constant 0.000000e+00 : f32
    %43 = vector.broadcast %cst_31 : f32 to vector<16x128xf32>
    %44 = arith.minimumf %40, %43 : vector<16x128xf32>
    %45 = math.exp %44 : vector<16x128xf32>
    %cst_32 = arith.constant 1.000000e+00 : f32
    %46 = vector.broadcast %cst_32 : f32 to vector<16x128xf32>
    %47 = arith.subf %45, %46 : vector<16x128xf32>
    %48 = arith.select %42, %40, %47 : vector<16x128xi1>, vector<16x128xf32>
    %49 = arith.truncf %48 : vector<16x128xf32> to vector<16x128xbf16>
    %c0_33 = arith.constant 0 : index
    %c0_34 = arith.constant 0 : index
    %50 = vector.load %arg9[%c0_33, %c0_34] : memref<128x128xbf16, #tpu.memory_space<vmem>>, vector<128x128xbf16>
    %cst_35 = arith.constant dense<0.000000e+00> : vector<16x128xf32>
    %51 = tpu.matmul %49, %50, %cst_35 {dimension_numbers = #tpu.dot_dimension_numbers<[1], [0], [0], [1], [0, 0, 1, 1], [], []>} : vector<16x128xbf16>, vector<128x128xbf16>, vector<16x128xf32> -> vector<16x128xf32>
    %c0_36 = arith.constant 0 : index
    %c0_37 = arith.constant 0 : index
    %52 = vector.load %arg10[%c0_36, %c0_37] : memref<1x128xf32, #tpu.memory_space<vmem>>, vector<1x128xf32>
    %53 = vector.broadcast %52 : vector<1x128xf32> to vector<16x128xf32>
    %54 = arith.addf %51, %53 : vector<16x128xf32>
    %cst_38 = arith.constant 0.000000e+00 : f32
    %55 = vector.broadcast %cst_38 : f32 to vector<16x128xf32>
    %56 = arith.cmpf ogt, %54, %55 : vector<16x128xf32>
    %cst_39 = arith.constant 0.000000e+00 : f32
    %57 = vector.broadcast %cst_39 : f32 to vector<16x128xf32>
    %58 = arith.minimumf %54, %57 : vector<16x128xf32>
    %59 = math.exp %58 : vector<16x128xf32>
    %cst_40 = arith.constant 1.000000e+00 : f32
    %60 = vector.broadcast %cst_40 : f32 to vector<16x128xf32>
    %61 = arith.subf %59, %60 : vector<16x128xf32>
    %62 = arith.select %56, %54, %61 : vector<16x128xi1>, vector<16x128xf32>
    %63 = arith.truncf %62 : vector<16x128xf32> to vector<16x128xbf16>
    %64 = arith.extf %63 : vector<16x128xbf16> to vector<16x128xf32>
    %c0_41 = arith.constant 0 : index
    %c0_42 = arith.constant 0 : index
    %65 = vector.load %arg13[%c0_41, %c0_42] : memref<1x128xf32, #tpu.memory_space<vmem>>, vector<1x128xf32>
    %66 = vector.broadcast %65 : vector<1x128xf32> to vector<16x128xf32>
    %67 = arith.mulf %64, %66 : vector<16x128xf32>
    %cst_43 = arith.constant dense<0.000000e+00> : vector<16xf32>
    %68 = vector.multi_reduction <add>, %67, %cst_43 [1] : vector<16x128xf32> to vector<16xf32>
    %69 = vector.shape_cast %68 : vector<16xf32> to vector<16x1xf32>
    %c0_44 = arith.constant 0 : index
    %c0_45 = arith.constant 0 : index
    %70 = vector.load %arg14[%c0_44, %c0_45] : memref<1x1xf32, #tpu.memory_space<vmem>>, vector<1x1xf32>
    %71 = vector.broadcast %70 : vector<1x1xf32> to vector<16x1xf32>
    %72 = arith.addf %69, %71 : vector<16x1xf32>
    %73 = tpu.iota {dimensions = array<i32: 1>} : vector<16x128xi32>
    %c0_i32 = arith.constant 0 : i32
    %74 = vector.broadcast %c0_i32 : i32 to vector<16x128xi32>
    %75 = arith.cmpi eq, %73, %74 : vector<16x128xi32>
    %cst_46 = arith.constant 0.000000e+00 : f32
    %76 = vector.shape_cast %72 : vector<16x1xf32> to vector<16x1xf32>
    %77 = vector.broadcast %76 : vector<16x1xf32> to vector<16x128xf32>
    %78 = vector.broadcast %cst_46 : f32 to vector<16x128xf32>
    %79 = arith.select %75, %77, %78 : vector<16x128xi1>, vector<16x128xf32>
    %c0_47 = arith.constant 0 : index
    %c128 = arith.constant 128 : index
    %80 = vector.load %arg15[%c0_47, %c128] : memref<16x256xf32, #tpu.memory_space<vmem>>, vector<16x128xf32>
    tpu.vector_store %arg15[%c0_47, %c128], %79 {strides = array<i32>} : memref<16x256xf32, #tpu.memory_space<vmem>>, vector<16x128xf32>,
    return
  }
  func.func @transform_0(%arg0: i32) -> (i32, i32) {
    %c0_i32 = arith.constant 0 : i32
    %c0_i32_0 = arith.constant 0 : i32
    return %arg0, %c0_i32 : i32, i32
  }
  func.func @transform_1(%arg0: i32) -> (i32, i32) {
    %c0_i32 = arith.constant 0 : i32
    %c0_i32_0 = arith.constant 0 : i32
    return %arg0, %c0_i32 : i32, i32
  }
  func.func @transform_2(%arg0: i32) -> (i32, i32) {
    %c0_i32 = arith.constant 0 : i32
    %c0_i32_0 = arith.constant 0 : i32
    %c0_i32_1 = arith.constant 0 : i32
    return %c0_i32, %c0_i32_0 : i32, i32
  }
  func.func @transform_3(%arg0: i32) -> (i32, i32) {
    %c0_i32 = arith.constant 0 : i32
    %c0_i32_0 = arith.constant 0 : i32
    %c0_i32_1 = arith.constant 0 : i32
    return %c0_i32, %c0_i32_0 : i32, i32
  }
  func.func @transform_4(%arg0: i32) -> (i32, i32) {
    %c0_i32 = arith.constant 0 : i32
    %c0_i32_0 = arith.constant 0 : i32
    %c0_i32_1 = arith.constant 0 : i32
    return %c0_i32, %c0_i32_0 : i32, i32
  }
  func.func @transform_5(%arg0: i32) -> (i32, i32) {
    %c0_i32 = arith.constant 0 : i32
    %c0_i32_0 = arith.constant 0 : i32
    %c0_i32_1 = arith.constant 0 : i32
    return %c0_i32, %c0_i32_0 : i32, i32
  }
  func.func @transform_6(%arg0: i32) -> (i32, i32) {
    %c0_i32 = arith.constant 0 : i32
    %c0_i32_0 = arith.constant 0 : i32
    %c0_i32_1 = arith.constant 0 : i32
    return %c0_i32, %c0_i32_0 : i32, i32
  }
  func.func @transform_7(%arg0: i32) -> (i32, i32) {
    %c0_i32 = arith.constant 0 : i32
    %c0_i32_0 = arith.constant 0 : i32
    %c0_i32_1 = arith.constant 0 : i32
    return %c0_i32, %c0_i32_0 : i32, i32
  }
  func.func @transform_8(%arg0: i32) -> (i32, i32) {
    %c0_i32 = arith.constant 0 : i32
    %c0_i32_0 = arith.constant 0 : i32
    %c0_i32_1 = arith.constant 0 : i32
    return %c0_i32, %c0_i32_0 : i32, i32
  }
  func.func @transform_9(%arg0: i32) -> (i32, i32) {
    %c0_i32 = arith.constant 0 : i32
    %c0_i32_0 = arith.constant 0 : i32
    %c0_i32_1 = arith.constant 0 : i32
    return %c0_i32, %c0_i32_0 : i32, i32
  }
  func.func @transform_10(%arg0: i32) -> (i32, i32) {
    %c0_i32 = arith.constant 0 : i32
    %c0_i32_0 = arith.constant 0 : i32
    %c0_i32_1 = arith.constant 0 : i32
    return %c0_i32, %c0_i32_0 : i32, i32
  }
  func.func @transform_11(%arg0: i32) -> (i32, i32) {
    %c0_i32 = arith.constant 0 : i32
    %c0_i32_0 = arith.constant 0 : i32
    %c0_i32_1 = arith.constant 0 : i32
    return %c0_i32, %c0_i32_0 : i32, i32
  }
  func.func @transform_12(%arg0: i32) -> (i32, i32) {
    %c0_i32 = arith.constant 0 : i32
    %c0_i32_0 = arith.constant 0 : i32
    %c0_i32_1 = arith.constant 0 : i32
    return %c0_i32, %c0_i32_0 : i32, i32
  }
  func.func @transform_13(%arg0: i32) -> (i32, i32) {
    %c0_i32 = arith.constant 0 : i32
    %c0_i32_0 = arith.constant 0 : i32
    %c0_i32_1 = arith.constant 0 : i32
    return %c0_i32, %c0_i32_0 : i32, i32
  }
  func.func @transform_14(%arg0: i32) -> (i32, i32) {
    %c0_i32 = arith.constant 0 : i32
    %c0_i32_0 = arith.constant 0 : i32
    return %arg0, %c0_i32 : i32, i32
  }
}

module attributes {stable_mosaic.version = 11 : i64} {
  func.func @kernel(%arg0: i32, %arg1: memref<16x128xbf16, #tpu.memory_space<vmem>>, %arg2: memref<16x128xbf16, #tpu.memory_space<vmem>>, %arg3: memref<128x128xbf16, #tpu.memory_space<vmem>>, %arg4: memref<1x128xf32, #tpu.memory_space<vmem>>, %arg5: memref<128x128xbf16, #tpu.memory_space<vmem>>, %arg6: memref<1x128xf32, #tpu.memory_space<vmem>>, %arg7: memref<128x128xbf16, #tpu.memory_space<vmem>>, %arg8: memref<1x128xf32, #tpu.memory_space<vmem>>, %arg9: memref<128x128xbf16, #tpu.memory_space<vmem>>, %arg10: memref<1x128xf32, #tpu.memory_space<vmem>>, %arg11: memref<128x128xbf16, #tpu.memory_space<vmem>>, %arg12: memref<1x128xf32, #tpu.memory_space<vmem>>, %arg13: memref<1x128xf32, #tpu.memory_space<vmem>>, %arg14: memref<1x1xf32, #tpu.memory_space<vmem>>, %arg15: memref<16x256xf32, #tpu.memory_space<vmem>>) attributes {dimension_semantics = [#tpu.dimension_semantics<parallel>], iteration_bounds = array<i64: 1>, scalar_prefetch = 0 : i64, scratch_operands = 0 : i64, tpu.core_type = #tpu.core_type<tc>, window_params = [{transform_indices = @transform_0, window_bounds = array<i64: 16, 128>}, {transform_indices = @transform_1, window_bounds = array<i64: 16, 128>}, {pipeline_mode = #tpu.pipeline_mode<synchronous>, transform_indices = @transform_2, window_bounds = array<i64: 128, 128>}, {pipeline_mode = #tpu.pipeline_mode<synchronous>, transform_indices = @transform_3, window_bounds = array<i64: 1, 128>}, {pipeline_mode = #tpu.pipeline_mode<synchronous>, transform_indices = @transform_4, window_bounds = array<i64: 128, 128>}, {pipeline_mode = #tpu.pipeline_mode<synchronous>, transform_indices = @transform_5, window_bounds = array<i64: 1, 128>}, {pipeline_mode = #tpu.pipeline_mode<synchronous>, transform_indices = @transform_6, window_bounds = array<i64: 128, 128>}, {pipeline_mode = #tpu.pipeline_mode<synchronous>, transform_indices = @transform_7, window_bounds = array<i64: 1, 128>}, {pipeline_mode = #tpu.pipeline_mode<synchronous>, transform_indices = @transform_8, window_bounds = array<i64: 128, 128>}, {pipeline_mode = #tpu.pipeline_mode<synchronous>, transform_indices = @transform_9, window_bounds = array<i64: 1, 128>}, {pipeline_mode = #tpu.pipeline_mode<synchronous>, transform_indices = @transform_10, window_bounds = array<i64: 128, 128>}, {pipeline_mode = #tpu.pipeline_mode<synchronous>, transform_indices = @transform_11, window_bounds = array<i64: 1, 128>}, {pipeline_mode = #tpu.pipeline_mode<synchronous>, transform_indices = @transform_12, window_bounds = array<i64: 1, 128>}, {pipeline_mode = #tpu.pipeline_mode<synchronous>, transform_indices = @transform_13, window_bounds = array<i64: 1, 1>}, {transform_indices = @transform_14, window_bounds = array<i64: 16, 256>}]} {
    %c0 = arith.constant 0 : index
    %c0_0 = arith.constant 0 : index
    %0 = vector.load %arg1[%c0, %c0_0] : memref<16x128xbf16, #tpu.memory_space<vmem>>, vector<16x128xbf16>
    %c0_1 = arith.constant 0 : index
    %c0_2 = arith.constant 0 : index
    %1 = vector.load %arg3[%c0_1, %c0_2] : memref<128x128xbf16, #tpu.memory_space<vmem>>, vector<128x128xbf16>
    %cst = arith.constant dense<0.000000e+00> : vector<16x128xf32>
    %2 = tpu.matmul %0, %1, %cst {dimension_numbers = #tpu.dot_dimension_numbers<[1], [0], [0], [1], [0, 0, 1, 1], [], []>} : vector<16x128xbf16>, vector<128x128xbf16>, vector<16x128xf32> -> vector<16x128xf32>
    %c0_3 = arith.constant 0 : index
    %c0_4 = arith.constant 0 : index
    %3 = vector.load %arg4[%c0_3, %c0_4] : memref<1x128xf32, #tpu.memory_space<vmem>>, vector<1x128xf32>
    %4 = vector.broadcast %3 : vector<1x128xf32> to vector<16x128xf32>
    %5 = arith.addf %2, %4 : vector<16x128xf32>
    %cst_5 = arith.constant 0.000000e+00 : f32
    %6 = vector.broadcast %cst_5 : f32 to vector<16x128xf32>
    %7 = arith.cmpf ogt, %5, %6 : vector<16x128xf32>
    %cst_6 = arith.constant 0.000000e+00 : f32
    %8 = vector.broadcast %cst_6 : f32 to vector<16x128xf32>
    %9 = arith.minimumf %5, %8 : vector<16x128xf32>
    %10 = math.exp %9 : vector<16x128xf32>
    %cst_7 = arith.constant 1.000000e+00 : f32
    %11 = vector.broadcast %cst_7 : f32 to vector<16x128xf32>
    %12 = arith.subf %10, %11 : vector<16x128xf32>
    %13 = arith.select %7, %5, %12 : vector<16x128xi1>, vector<16x128xf32>
    %14 = arith.truncf %13 : vector<16x128xf32> to vector<16x128xbf16>
    %c0_8 = arith.constant 0 : index
    %c0_9 = arith.constant 0 : index
    %15 = vector.load %arg5[%c0_8, %c0_9] : memref<128x128xbf16, #tpu.memory_space<vmem>>, vector<128x128xbf16>
    %cst_10 = arith.constant dense<0.000000e+00> : vector<16x128xf32>
    %16 = tpu.matmul %14, %15, %cst_10 {dimension_numbers = #tpu.dot_dimension_numbers<[1], [0], [0], [1], [0, 0, 1, 1], [], []>} : vector<16x128xbf16>, vector<128x128xbf16>, vector<16x128xf32> -> vector<16x128xf32>
    %c0_11 = arith.constant 0 : index
    %c0_12 = arith.constant 0 : index
    %17 = vector.load %arg6[%c0_11, %c0_12] : memref<1x128xf32, #tpu.memory_space<vmem>>, vector<1x128xf32>
    %18 = vector.broadcast %17 : vector<1x128xf32> to vector<16x128xf32>
    %19 = arith.addf %16, %18 : vector<16x128xf32>
    %cst_13 = arith.constant 0.000000e+00 : f32
    %20 = vector.broadcast %cst_13 : f32 to vector<16x128xf32>
    %21 = arith.cmpf ogt, %19, %20 : vector<16x128xf32>
    %cst_14 = arith.constant 0.000000e+00 : f32
    %22 = vector.broadcast %cst_14 : f32 to vector<16x128xf32>
    %23 = arith.minimumf %19, %22 : vector<16x128xf32>
    %24 = math.exp %23 : vector<16x128xf32>
    %cst_15 = arith.constant 1.000000e+00 : f32
    %25 = vector.broadcast %cst_15 : f32 to vector<16x128xf32>
    %26 = arith.subf %24, %25 : vector<16x128xf32>
    %27 = arith.select %21, %19, %26 : vector<16x128xi1>, vector<16x128xf32>
    %28 = arith.truncf %27 : vector<16x128xf32> to vector<16x128xbf16>
    %c0_16 = arith.constant 0 : index
    %c0_17 = arith.constant 0 : index
    %29 = vector.load %arg11[%c0_16, %c0_17] : memref<128x128xbf16, #tpu.memory_space<vmem>>, vector<128x128xbf16>
    %cst_18 = arith.constant dense<0.000000e+00> : vector<16x128xf32>
    %30 = tpu.matmul %28, %29, %cst_18 {dimension_numbers = #tpu.dot_dimension_numbers<[1], [0], [0], [1], [0, 0, 1, 1], [], []>} : vector<16x128xbf16>, vector<128x128xbf16>, vector<16x128xf32> -> vector<16x128xf32>
    %c0_19 = arith.constant 0 : index
    %c0_20 = arith.constant 0 : index
    %31 = vector.load %arg12[%c0_19, %c0_20] : memref<1x128xf32, #tpu.memory_space<vmem>>, vector<1x128xf32>
    %32 = vector.broadcast %31 : vector<1x128xf32> to vector<16x128xf32>
    %33 = arith.addf %30, %32 : vector<16x128xf32>
    %c0_21 = arith.constant 0 : index
    %c0_22 = arith.constant 0 : index
    %34 = vector.load %arg15[%c0_21, %c0_22] : memref<16x256xf32, #tpu.memory_space<vmem>>, vector<16x128xf32>
    tpu.vector_store %arg15[%c0_21, %c0_22], %33 {strides = array<i32>} : memref<16x256xf32, #tpu.memory_space<vmem>>, vector<16x128xf32>,
    %c0_23 = arith.constant 0 : index
    %c0_24 = arith.constant 0 : index
    %35 = vector.load %arg2[%c0_23, %c0_24] : memref<16x128xbf16, #tpu.memory_space<vmem>>, vector<16x128xbf16>
    %c0_25 = arith.constant 0 : index
    %c0_26 = arith.constant 0 : index
    %36 = vector.load %arg7[%c0_25, %c0_26] : memref<128x128xbf16, #tpu.memory_space<vmem>>, vector<128x128xbf16>
    %cst_27 = arith.constant dense<0.000000e+00> : vector<16x128xf32>
    %37 = tpu.matmul %35, %36, %cst_27 {dimension_numbers = #tpu.dot_dimension_numbers<[1], [0], [0], [1], [0, 0, 1, 1], [], []>} : vector<16x128xbf16>, vector<128x128xbf16>, vector<16x128xf32> -> vector<16x128xf32>
    %c0_28 = arith.constant 0 : index
    %c0_29 = arith.constant 0 : index
    %38 = vector.load %arg8[%c0_28, %c0_29] : memref<1x128xf32, #tpu.memory_space<vmem>>, vector<1x128xf32>
    %39 = vector.broadcast %38 : vector<1x128xf32> to vector<16x128xf32>
    %40 = arith.addf %37, %39 : vector<16x128xf32>
    %cst_30 = arith.constant 0.000000e+00 : f32
    %41 = vector.broadcast %cst_30 : f32 to vector<16x128xf32>
    %42 = arith.cmpf ogt, %40, %41 : vector<16x128xf32>
    %cst_31 = arith.constant 0.000000e+00 : f32
    %43 = vector.broadcast %cst_31 : f32 to vector<16x128xf32>
    %44 = arith.minimumf %40, %43 : vector<16x128xf32>
    %45 = math.exp %44 : vector<16x128xf32>
    %cst_32 = arith.constant 1.000000e+00 : f32
    %46 = vector.broadcast %cst_32 : f32 to vector<16x128xf32>
    %47 = arith.subf %45, %46 : vector<16x128xf32>
    %48 = arith.select %42, %40, %47 : vector<16x128xi1>, vector<16x128xf32>
    %49 = arith.truncf %48 : vector<16x128xf32> to vector<16x128xbf16>
    %c0_33 = arith.constant 0 : index
    %c0_34 = arith.constant 0 : index
    %50 = vector.load %arg9[%c0_33, %c0_34] : memref<128x128xbf16, #tpu.memory_space<vmem>>, vector<128x128xbf16>
    %cst_35 = arith.constant dense<0.000000e+00> : vector<16x128xf32>
    %51 = tpu.matmul %49, %50, %cst_35 {dimension_numbers = #tpu.dot_dimension_numbers<[1], [0], [0], [1], [0, 0, 1, 1], [], []>} : vector<16x128xbf16>, vector<128x128xbf16>, vector<16x128xf32> -> vector<16x128xf32>
    %c0_36 = arith.constant 0 : index
    %c0_37 = arith.constant 0 : index
    %52 = vector.load %arg10[%c0_36, %c0_37] : memref<1x128xf32, #tpu.memory_space<vmem>>, vector<1x128xf32>
    %53 = vector.broadcast %52 : vector<1x128xf32> to vector<16x128xf32>
    %54 = arith.addf %51, %53 : vector<16x128xf32>
    %cst_38 = arith.constant 0.000000e+00 : f32
    %55 = vector.broadcast %cst_38 : f32 to vector<16x128xf32>
    %56 = arith.cmpf ogt, %54, %55 : vector<16x128xf32>
    %cst_39 = arith.constant 0.000000e+00 : f32
    %57 = vector.broadcast %cst_39 : f32 to vector<16x128xf32>
    %58 = arith.minimumf %54, %57 : vector<16x128xf32>
    %59 = math.exp %58 : vector<16x128xf32>
    %cst_40 = arith.constant 1.000000e+00 : f32
    %60 = vector.broadcast %cst_40 : f32 to vector<16x128xf32>
    %61 = arith.subf %59, %60 : vector<16x128xf32>
    %62 = arith.select %56, %54, %61 : vector<16x128xi1>, vector<16x128xf32>
    %63 = arith.truncf %62 : vector<16x128xf32> to vector<16x128xbf16>
    %64 = arith.extf %63 : vector<16x128xbf16> to vector<16x128xf32>
    %c0_41 = arith.constant 0 : index
    %c0_42 = arith.constant 0 : index
    %65 = vector.load %arg13[%c0_41, %c0_42] : memref<1x128xf32, #tpu.memory_space<vmem>>, vector<1x128xf32>
    %66 = vector.broadcast %65 : vector<1x128xf32> to vector<16x128xf32>
    %67 = arith.mulf %64, %66 : vector<16x128xf32>
    %cst_43 = arith.constant dense<0.000000e+00> : vector<16xf32>
    %68 = vector.multi_reduction <add>, %67, %cst_43 [1] : vector<16x128xf32> to vector<16xf32>
    %69 = vector.shape_cast %68 : vector<16xf32> to vector<16x1xf32>
    %c0_44 = arith.constant 0 : index
    %c0_45 = arith.constant 0 : index
    %70 = vector.load %arg14[%c0_44, %c0_45] : memref<1x1xf32, #tpu.memory_space<vmem>>, vector<1x1xf32>
    %71 = vector.broadcast %70 : vector<1x1xf32> to vector<16x1xf32>
    %72 = arith.addf %69, %71 : vector<16x1xf32>
    %73 = tpu.iota {dimensions = array<i32: 1>} : vector<16x128xi32>
    %c0_i32 = arith.constant 0 : i32
    %74 = vector.broadcast %c0_i32 : i32 to vector<16x128xi32>
    %75 = arith.cmpi eq, %73, %74 : vector<16x128xi32>
    %cst_46 = arith.constant 0.000000e+00 : f32
    %76 = vector.shape_cast %72 : vector<16x1xf32> to vector<16x1xf32>
    %77 = vector.broadcast %76 : vector<16x1xf32> to vector<16x128xf32>
    %78 = vector.broadcast %cst_46 : f32 to vector<16x128xf32>
    %79 = arith.select %75, %77, %78 : vector<16x128xi1>, vector<16x128xf32>
    %c0_47 = arith.constant 0 : index
    %c128 = arith.constant 128 : index
    %80 = vector.load %arg15[%c0_47, %c128] : memref<16x256xf32, #tpu.memory_space<vmem>>, vector<16x128xf32>
    tpu.vector_store %arg15[%c0_47, %c128], %79 {strides = array<i32>} : memref<16x256xf32, #tpu.memory_space<vmem>>, vector<16x128xf32>,
    return
  }
  func.func @transform_0(%arg0: i32) -> (i32, i32) {
    %c0_i32 = arith.constant 0 : i32
    %c0_i32_0 = arith.constant 0 : i32
    return %arg0, %c0_i32 : i32, i32
  }
  func.func @transform_1(%arg0: i32) -> (i32, i32) {
    %c0_i32 = arith.constant 0 : i32
    %c0_i32_0 = arith.constant 0 : i32
    return %arg0, %c0_i32 : i32, i32
  }
  func.func @transform_2(%arg0: i32) -> (i32, i32) {
    %c0_i32 = arith.constant 0 : i32
    %c0_i32_0 = arith.constant 0 : i32
    %c0_i32_1 = arith.constant 0 : i32
    return %c0_i32, %c0_i32_0 : i32, i32
  }
  func.func @transform_3(%arg0: i32) -> (i32, i32) {
    %c0_i32 = arith.constant 0 : i32
    %c0_i32_0 = arith.constant 0 : i32
    %c0_i32_1 = arith.constant 0 : i32
    return %c0_i32, %c0_i32_0 : i32, i32
  }
  func.func @transform_4(%arg0: i32) -> (i32, i32) {
    %c0_i32 = arith.constant 0 : i32
    %c0_i32_0 = arith.constant 0 : i32
    %c0_i32_1 = arith.constant 0 : i32
    return %c0_i32, %c0_i32_0 : i32, i32
  }
  func.func @transform_5(%arg0: i32) -> (i32, i32) {
    %c0_i32 = arith.constant 0 : i32
    %c0_i32_0 = arith.constant 0 : i32
    %c0_i32_1 = arith.constant 0 : i32
    return %c0_i32, %c0_i32_0 : i32, i32
  }
  func.func @transform_6(%arg0: i32) -> (i32, i32) {
    %c0_i32 = arith.constant 0 : i32
    %c0_i32_0 = arith.constant 0 : i32
    %c0_i32_1 = arith.constant 0 : i32
    return %c0_i32, %c0_i32_0 : i32, i32
  }
  func.func @transform_7(%arg0: i32) -> (i32, i32) {
    %c0_i32 = arith.constant 0 : i32
    %c0_i32_0 = arith.constant 0 : i32
    %c0_i32_1 = arith.constant 0 : i32
    return %c0_i32, %c0_i32_0 : i32, i32
  }
  func.func @transform_8(%arg0: i32) -> (i32, i32) {
    %c0_i32 = arith.constant 0 : i32
    %c0_i32_0 = arith.constant 0 : i32
    %c0_i32_1 = arith.constant 0 : i32
    return %c0_i32, %c0_i32_0 : i32, i32
  }
  func.func @transform_9(%arg0: i32) -> (i32, i32) {
    %c0_i32 = arith.constant 0 : i32
    %c0_i32_0 = arith.constant 0 : i32
    %c0_i32_1 = arith.constant 0 : i32
    return %c0_i32, %c0_i32_0 : i32, i32
  }
  func.func @transform_10(%arg0: i32) -> (i32, i32) {
    %c0_i32 = arith.constant 0 : i32
    %c0_i32_0 = arith.constant 0 : i32
    %c0_i32_1 = arith.constant 0 : i32
    return %c0_i32, %c0_i32_0 : i32, i32
  }
  func.func @transform_11(%arg0: i32) -> (i32, i32) {
    %c0_i32 = arith.constant 0 : i32
    %c0_i32_0 = arith.constant 0 : i32
    %c0_i32_1 = arith.constant 0 : i32
    return %c0_i32, %c0_i32_0 : i32, i32
  }
  func.func @transform_12(%arg0: i32) -> (i32, i32) {
    %c0_i32 = arith.constant 0 : i32
    %c0_i32_0 = arith.constant 0 : i32
    %c0_i32_1 = arith.constant 0 : i32
    return %c0_i32, %c0_i32_0 : i32, i32
  }
  func.func @transform_13(%arg0: i32) -> (i32, i32) {
    %c0_i32 = arith.constant 0 : i32
    %c0_i32_0 = arith.constant 0 : i32
    %c0_i32_1 = arith.constant 0 : i32
    return %c0_i32, %c0_i32_0 : i32, i32
  }
  func.func @transform_14(%arg0: i32) -> (i32, i32) {
    %c0_i32 = arith.constant 0 : i32
    %c0_i32_0 = arith.constant 0 : i32
    return %arg0, %c0_i32 : i32, i32
  }
}

</mosaic_0001>

<llo_original>
// kernel: tpu_custom_call.1
$region0: #{tpu_custom_call.1}
  #allocation0 [shape = 'u32[]', space=smem, size = 0x4, offset = 0x4, fixed_abs, tag = 'smem constant byte address 0x4 - core index']
  #allocation1 [shape = 'u32[144,128]{1,0:T(1,128)}', space=vmem, size = 0x12000, scoped, tag = 'internal scratch']
  #allocation2 [shape = 'f32[1,1]{1,0:T(1,128)S(1)}', space=vmem, size = 0x200, scoped, tag = 'scoped memory for tpu_custom_call.1']
  %s0 = inlined_call_operand.hbm [shape: bf16[16,128], index: 0, kind: input, shape index: {}]
  %s1 = inlined_call_operand.hbm [shape: bf16[16,128], index: 1, kind: input, shape index: {}]
  %s2 = inlined_call_operand.hbm [shape: bf16[128,128], index: 2, kind: input, shape index: {}]
  %s3 = inlined_call_operand.vmem [shape: f32[1,128], index: 3, kind: input, shape index: {}]
  %s4 = inlined_call_operand.hbm [shape: bf16[128,128], index: 4, kind: input, shape index: {}]
  %s5 = inlined_call_operand.vmem [shape: f32[1,128], index: 5, kind: input, shape index: {}]
  %s6 = inlined_call_operand.hbm [shape: bf16[128,128], index: 6, kind: input, shape index: {}]
  %s7 = inlined_call_operand.vmem [shape: f32[1,128], index: 7, kind: input, shape index: {}]
  %s8 = inlined_call_operand.hbm [shape: bf16[128,128], index: 8, kind: input, shape index: {}]
  %s9 = inlined_call_operand.vmem [shape: f32[1,128], index: 9, kind: input, shape index: {}]
  %s10 = inlined_call_operand.hbm [shape: bf16[128,128], index: 10, kind: input, shape index: {}]
  %s11 = inlined_call_operand.vmem [shape: f32[1,128], index: 11, kind: input, shape index: {}]
  %s12 = inlined_call_operand.vmem [shape: f32[1,128], index: 12, kind: input, shape index: {}]
  %s13 = inlined_call_operand.<no memory space> [shape: f32[1,1], index: 13, kind: input, shape index: {}]
  %s14 = inlined_call_operand.hbm [shape: f32[16,256], index: 14, kind: output, shape index: {}]
  %s15 = sld [smem:[#allocation0]]
  $region94: #{tpu_custom_call.1} parent=0
    _
  %s17 = ssub.s32 1, %s15
  %s18 = scalar_select 0, %s17, %s15
  %v19 = vstv %s13
  %20 = vst [vmem:[#allocation2] sm:$0x1] %v19
  $region1: #{tpu_custom_call.1} parent=0
    #allocation3 [shape = 'u8[4096]{0}', space=vmem, size = 0x1000, scoped, tag = 'input window, operand 0, single buffered']
    #allocation4 [shape = 's32[1]{0}', space=sflag, size = 0x4, scoped, tag = 'scoped memory for tpu_custom_call.1']
    #allocation5 [shape = 's32[1]{0}', space=sflag, size = 0x4, scoped, tag = 'scoped memory for tpu_custom_call.1']
    #allocation6 [shape = 'u8[4096]{0}', space=vmem, size = 0x1000, scoped, tag = 'input window, operand 1, single buffered']
    #allocation7 [shape = 's32[1]{0}', space=sflag, size = 0x4, scoped, tag = 'scoped memory for tpu_custom_call.1']
    #allocation8 [shape = 'u8[32768]{0}', space=vmem, size = 0x8000, scoped, tag = 'input window, operand 2, single buffered']
    #allocation9 [shape = 'u8[32768]{0}', space=vmem, size = 0x8000, scoped, tag = 'input window, operand 4, single buffered']
    #allocation10 [shape = 's32[1]{0}', space=sflag, size = 0x4, scoped, tag = 'scoped memory for tpu_custom_call.1']
    #allocation11 [shape = 'u8[32768]{0}', space=vmem, size = 0x8000, scoped, tag = 'input window, operand 6, single buffered']
    #allocation12 [shape = 'u8[32768]{0}', space=vmem, size = 0x8000, scoped, tag = 'input window, operand 8, single buffered']
    #allocation13 [shape = 's32[1]{0}', space=sflag, size = 0x4, scoped, tag = 'scoped memory for tpu_custom_call.1']
    #allocation14 [shape = 'u8[32768]{0}', space=vmem, size = 0x8000, scoped, tag = 'input window, operand 10, single buffered']
    #allocation15 [shape = 'u8[16384]{0}', space=vmem, size = 0x4000, scoped, tag = 'output window, operand 0, single buffered']
    %21 = vsyncpa [#allocation4], 0
    %22 = vsyncpa [#allocation7], 0
    %23 = vsyncpa [#allocation10], 0
    %24 = vsyncpa [#allocation13], 0
    %25 = vsyncpa [#allocation5], 0
    // Predicated region
    $region2: #{tpu_custom_call.1} parent=1 // pred_check
      _
    $region3: #{tpu_custom_call.1} parent=1 // pred_check_branch
      %27 = sbr.rel (0) target = $region5
    $region4: #{tpu_custom_call.1} parent=1 // pred_region
      %s29 = ssub.s32 128, 128
      %30 = vsyncadd [#allocation4], %s29
      %s31 = sshll.u32 [#allocation3], 4
      %s32 = int_to_ptr.vmem [resolvable:$true] %s31
      %37 = dma.hbm_to_vmem [thread:$0]  %s0, 128, %s32, [#allocation4], 64, 64, 4
    $region5: #{tpu_custom_call.1} parent=1 // pred_fallthru
      _
    // Predicated region
    $region6: #{tpu_custom_call.1} parent=1 // pred_check
      _
    $region7: #{tpu_custom_call.1} parent=1 // pred_check_branch
      %39 = sbr.rel (0) target = $region9
    $region8: #{tpu_custom_call.1} parent=1 // pred_region
      %s41 = ssub.s32 128, 128
      %42 = vsyncadd [#allocation7], %s41
      %s43 = sshll.u32 [#allocation6], 4
      %s44 = int_to_ptr.vmem [resolvable:$true] %s43
      %49 = dma.hbm_to_vmem [thread:$0]  %s1, 128, %s44, [#allocation7], 64, 64, 4
    $region9: #{tpu_custom_call.1} parent=1 // pred_fallthru
      _
    // Predicated region
    $region10: #{tpu_custom_call.1} parent=1 // pred_check
      _
    $region11: #{tpu_custom_call.1} parent=1 // pred_check_branch
      %51 = sbr.rel (0) target = $region13
    $region12: #{tpu_custom_call.1} parent=1 // pred_region
      %s53 = ssub.s32 1024, 1024
      %54 = vsyncadd [#allocation7], %s53
      %s55 = sshll.u32 [#allocation8], 4
      %s56 = int_to_ptr.vmem [resolvable:$true] %s55
      %61 = dma.hbm_to_vmem [thread:$0]  %s2, 1024, %s56, [#allocation7], 64, 64, 4
    $region13: #{tpu_custom_call.1} parent=1 // pred_fallthru
      _
    // Predicated region
    $region14: #{tpu_custom_call.1} parent=1 // pred_check
      _
    $region15: #{tpu_custom_call.1} parent=1 // pred_check_branch
      %63 = sbr.rel (0) target = $region17
    $region16: #{tpu_custom_call.1} parent=1 // pred_region
      _
    $region17: #{tpu_custom_call.1} parent=1 // pred_fallthru
      _
    // Predicated region
    $region18: #{tpu_custom_call.1} parent=1 // pred_check
      _
    $region19: #{tpu_custom_call.1} parent=1 // pred_check_branch
      %65 = sbr.rel (0) target = $region21
    $region20: #{tpu_custom_call.1} parent=1 // pred_region
      %s67 = ssub.s32 1024, 1024
      %68 = vsyncadd [#allocation10], %s67
      %s69 = sshll.u32 [#allocation9], 4
      %s70 = int_to_ptr.vmem [resolvable:$true] %s69
      %75 = dma.hbm_to_vmem [thread:$0]  %s4, 1024, %s70, [#allocation10], 64, 64, 4
    $region21: #{tpu_custom_call.1} parent=1 // pred_fallthru
      _
    // Predicated region
    $region22: #{tpu_custom_call.1} parent=1 // pred_check
      _
    $region23: #{tpu_custom_call.1} parent=1 // pred_check_branch
      %77 = sbr.rel (0) target = $region25
    $region24: #{tpu_custom_call.1} parent=1 // pred_region
      _
    $region25: #{tpu_custom_call.1} parent=1 // pred_fallthru
      _
    // Predicated region
    $region26: #{tpu_custom_call.1} parent=1 // pred_check
      _
    $region27: #{tpu_custom_call.1} parent=1 // pred_check_branch
      %79 = sbr.rel (0) target = $region29
    $region28: #{tpu_custom_call.1} parent=1 // pred_region
      %s81 = ssub.s32 1024, 1024
      %82 = vsyncadd [#allocation10], %s81
      %s83 = sshll.u32 [#allocation11], 4
      %s84 = int_to_ptr.vmem [resolvable:$true] %s83
      %89 = dma.hbm_to_vmem [thread:$0]  %s6, 1024, %s84, [#allocation10], 64, 64, 4
    $region29: #{tpu_custom_call.1} parent=1 // pred_fallthru
      _
    // Predicated region
    $region30: #{tpu_custom_call.1} parent=1 // pred_check
      _
    $region31: #{tpu_custom_call.1} parent=1 // pred_check_branch
      %91 = sbr.rel (0) target = $region33
    $region32: #{tpu_custom_call.1} parent=1 // pred_region
      _
    $region33: #{tpu_custom_call.1} parent=1 // pred_fallthru
      _
    // Predicated region
    $region34: #{tpu_custom_call.1} parent=1 // pred_check
      _
    $region35: #{tpu_custom_call.1} parent=1 // pred_check_branch
      %93 = sbr.rel (0) target = $region37
    $region36: #{tpu_custom_call.1} parent=1 // pred_region
      %s95 = ssub.s32 1024, 1024
      %96 = vsyncadd [#allocation13], %s95
      %s97 = sshll.u32 [#allocation12], 4
      %s98 = int_to_ptr.vmem [resolvable:$true] %s97
      %103 = dma.hbm_to_vmem [thread:$0]  %s8, 1024, %s98, [#allocation13], 64, 64, 4
    $region37: #{tpu_custom_call.1} parent=1 // pred_fallthru
      _
    // Predicated region
    $region38: #{tpu_custom_call.1} parent=1 // pred_check
      _
    $region39: #{tpu_custom_call.1} parent=1 // pred_check_branch
      %105 = sbr.rel (0) target = $region41
    $region40: #{tpu_custom_call.1} parent=1 // pred_region
      _
    $region41: #{tpu_custom_call.1} parent=1 // pred_fallthru
      _
    // Predicated region
    $region42: #{tpu_custom_call.1} parent=1 // pred_check
      _
    $region43: #{tpu_custom_call.1} parent=1 // pred_check_branch
      %107 = sbr.rel (0) target = $region45
    $region44: #{tpu_custom_call.1} parent=1 // pred_region
      %s109 = ssub.s32 1024, 1024
      %110 = vsyncadd [#allocation13], %s109
      %s111 = sshll.u32 [#allocation14], 4
      %s112 = int_to_ptr.vmem [resolvable:$true] %s111
      %117 = dma.hbm_to_vmem [thread:$0]  %s10, 1024, %s112, [#allocation13], 64, 64, 4
    $region45: #{tpu_custom_call.1} parent=1 // pred_fallthru
      _
    // Predicated region
    $region46: #{tpu_custom_call.1} parent=1 // pred_check
      _
    $region47: #{tpu_custom_call.1} parent=1 // pred_check_branch
      %119 = sbr.rel (0) target = $region49
    $region48: #{tpu_custom_call.1} parent=1 // pred_region
      _
    $region49: #{tpu_custom_call.1} parent=1 // pred_fallthru
      _
    // Predicated region
    $region50: #{tpu_custom_call.1} parent=1 // pred_check
      _
    $region51: #{tpu_custom_call.1} parent=1 // pred_check_branch
      %121 = sbr.rel (0) target = $region53
    $region52: #{tpu_custom_call.1} parent=1 // pred_region
      _
    $region53: #{tpu_custom_call.1} parent=1 // pred_fallthru
      _
    // Predicated region
    $region54: #{tpu_custom_call.1} parent=1 // pred_check
      _
    $region55: #{tpu_custom_call.1} parent=1 // pred_check_branch
      %123 = sbr.rel (0) target = $region57
    $region56: #{tpu_custom_call.1} parent=1 // pred_region
      _
    $region57: #{tpu_custom_call.1} parent=1 // pred_fallthru
      _
    // Predicated region
    $region58: #{tpu_custom_call.1} parent=1 // pred_check
      _
    $region59: #{tpu_custom_call.1} parent=1 // pred_check_branch
      %125 = sbr.rel (0) target = $region61
    $region60: #{tpu_custom_call.1} parent=1 // pred_region
      %126 = dma.done [#allocation4], 128
    $region61: #{tpu_custom_call.1} parent=1 // pred_fallthru
      _
    // Predicated region
    $region62: #{tpu_custom_call.1} parent=1 // pred_check
      _
    $region63: #{tpu_custom_call.1} parent=1 // pred_check_branch
      %128 = sbr.rel (0) target = $region65
    $region64: #{tpu_custom_call.1} parent=1 // pred_region
      %129 = dma.done [#allocation7], 128
    $region65: #{tpu_custom_call.1} parent=1 // pred_fallthru
      _
    // Predicated region
    $region66: #{tpu_custom_call.1} parent=1 // pred_check
      _
    $region67: #{tpu_custom_call.1} parent=1 // pred_check_branch
      %131 = sbr.rel (0) target = $region69
    $region68: #{tpu_custom_call.1} parent=1 // pred_region
      %132 = dma.done [#allocation7], 1024
    $region69: #{tpu_custom_call.1} parent=1 // pred_fallthru
      _
    // Predicated region
    $region70: #{tpu_custom_call.1} parent=1 // pred_check
      _
    $region71: #{tpu_custom_call.1} parent=1 // pred_check_branch
      %134 = sbr.rel (0) target = $region73
    $region72: #{tpu_custom_call.1} parent=1 // pred_region
      %135 = dma.done [#allocation10], 1024
    $region73: #{tpu_custom_call.1} parent=1 // pred_fallthru
      _
    // Predicated region
    $region74: #{tpu_custom_call.1} parent=1 // pred_check
      _
    $region75: #{tpu_custom_call.1} parent=1 // pred_check_branch
      %137 = sbr.rel (0) target = $region77
    $region76: #{tpu_custom_call.1} parent=1 // pred_region
      %138 = dma.done [#allocation10], 1024
    $region77: #{tpu_custom_call.1} parent=1 // pred_fallthru
      _
    // Predicated region
    $region78: #{tpu_custom_call.1} parent=1 // pred_check
      _
    $region79: #{tpu_custom_call.1} parent=1 // pred_check_branch
      %140 = sbr.rel (0) target = $region81
    $region80: #{tpu_custom_call.1} parent=1 // pred_region
      %141 = dma.done [#allocation13], 1024
    $region81: #{tpu_custom_call.1} parent=1 // pred_fallthru
      _
    // Predicated region
    $region82: #{tpu_custom_call.1} parent=1 // pred_check
      _
    $region83: #{tpu_custom_call.1} parent=1 // pred_check_branch
      %143 = sbr.rel (0) target = $region85
    $region84: #{tpu_custom_call.1} parent=1 // pred_region
      %144 = dma.done [#allocation13], 1024
    $region85: #{tpu_custom_call.1} parent=1 // pred_fallthru
      _
    %v146 = vld [vmem:[#allocation3] sm:$0xf]
    %v147 = vld [vmem:[#allocation3 + $0x4] sm:$0xf]
    %v148 = vld [vmem:[#allocation8] sm:$0xf]
    %v149 = vld [vmem:[#allocation8 + $0x4] sm:$0xf]
    %v150 = vld [vmem:[#allocation8 + $0x8] sm:$0xf]
    %v151 = vld [vmem:[#allocation8 + $0xc] sm:$0xf]
    %v152 = vld [vmem:[#allocation8 + $0x10] sm:$0xf]
    %v153 = vld [vmem:[#allocation8 + $0x14] sm:$0xf]
    %v154 = vld [vmem:[#allocation8 + $0x18] sm:$0xf]
    %v155 = vld [vmem:[#allocation8 + $0x1c] sm:$0xf]
    %v156 = vld [vmem:[#allocation8 + $0x20] sm:$0xf]
    %v157 = vld [vmem:[#allocation8 + $0x24] sm:$0xf]
    %v158 = vld [vmem:[#allocation8 + $0x28] sm:$0xf]
    %v159 = vld [vmem:[#allocation8 + $0x2c] sm:$0xf]
    %v160 = vld [vmem:[#allocation8 + $0x30] sm:$0xf]
    %v161 = vld [vmem:[#allocation8 + $0x34] sm:$0xf]
    %v162 = vld [vmem:[#allocation8 + $0x38] sm:$0xf]
    %v163 = vld [vmem:[#allocation8 + $0x3c] sm:$0xf]
    %v164 = vld [vmem:[%s3] sm:$0x1]
    %v166 = vlaneseq
    %v167 = vshrl.u32 %v166, 7
    %v168 = vsub.s32 0, %v167
    %v169 = vrot.slane %v164, %v168
    %v173 = vunpack.c.l.b16 %v146
    %v174 = vunpack.c.l.b16 %v147
    %v175 = vpack.c.b16 %v174, %v173
    %v193 = vunpack.c.l.b16 %v148
    %v194 = vunpack.c.l.b16 %v149
    %v195 = vunpack.c.l.b16 %v150
    %v196 = vunpack.c.l.b16 %v151
    %v197 = vunpack.c.l.b16 %v152
    %v198 = vunpack.c.l.b16 %v153
    %v199 = vunpack.c.l.b16 %v154
    %v200 = vunpack.c.l.b16 %v155
    %v201 = vunpack.c.l.b16 %v156
    %v202 = vunpack.c.l.b16 %v157
    %v203 = vunpack.c.l.b16 %v158
    %v204 = vunpack.c.l.b16 %v159
    %v205 = vunpack.c.l.b16 %v160
    %v206 = vunpack.c.l.b16 %v161
    %v207 = vunpack.c.l.b16 %v162
    %v208 = vunpack.c.l.b16 %v163
    %v209 = vpack.c.b16 %v194, %v193
    %v210 = vpack.c.b16 %v196, %v195
    %v211 = vpack.c.b16 %v198, %v197
    %v212 = vpack.c.b16 %v200, %v199
    %v213 = vpack.c.b16 %v202, %v201
    %v214 = vpack.c.b16 %v204, %v203
    %v215 = vpack.c.b16 %v206, %v205
    %v216 = vpack.c.b16 %v208, %v207
    %225 = vmatprep.subr.bf16.mxu0 0
    %226 = vmatpush1.bf16.msra.mxu0 %v216
    %227 = vmatprep.subr.bf16.mxu0 0
    %228 = vmatpush1.bf16.msra.mxu0 %v215
    %229 = vmatprep.subr.bf16.mxu0 0
    %230 = vmatpush1.bf16.msra.mxu0 %v214
    %231 = vmatprep.subr.bf16.mxu0 0
    %232 = vmatpush1.bf16.msra.mxu0 %v213
    %233 = vmatprep.subr.bf16.mxu0 0
    %234 = vmatpush1.bf16.msra.mxu0 %v212
    %235 = vmatprep.subr.bf16.mxu0 0
    %236 = vmatpush1.bf16.msra.mxu0 %v211
    %237 = vmatprep.subr.bf16.mxu0 0
    %238 = vmatpush1.bf16.msra.mxu0 %v210
    %239 = vmatprep.subr.bf16.mxu0 0
    %240 = vmatpush1.bf16.msra.mxu0 %v209
    %241 = vmatprep.subr.bf16.mxu0 0
    %242 = vmatpush2.bf16.msra.mxu0 0
    %243 = vmatprep.subr.bf16.mxu0 0
    %244 = vmatpush2.bf16.msra.mxu0 0
    %245 = vmatprep.subr.bf16.mxu0 0
    %246 = vmatpush2.bf16.msra.mxu0 0
    %247 = vmatprep.subr.bf16.mxu0 0
    %248 = vmatpush2.bf16.msra.mxu0 0
    %249 = vmatprep.subr.bf16.mxu0 0
    %250 = vmatpush2.bf16.msra.mxu0 0
    %251 = vmatprep.subr.bf16.mxu0 0
    %252 = vmatpush2.bf16.msra.mxu0 0
    %253 = vmatprep.subr.bf16.mxu0 0
    %254 = vmatpush2.bf16.msra.mxu0 0
    %255 = vmatprep.subr.bf16.mxu0 0
    %256 = vmatpush2.bf16.msra.mxu0 0
    %257 = vmatprep.mubr.bf16.mxu0 0
    %258 = vmatmul.mubr.bf16.gmra.mxu0 %v175
    %v259 = vpop.f32.mrf.mxu0
    %v260 = vadd.f32 %v169, %v259
    %v261 = vpop.f32.mrf.mxu0
    %v262 = vpop.f32.mrf.mxu0
    %v263 = vadd.f32 %v169, %v262
    %v264 = vpop.f32.mrf.mxu0
    %265 = vdwg.mxu0
    %vm266 = vcmp.gt.f32.partialorder %v260, 0.0
    %vm267 = vcmp.gt.f32.partialorder %v263, 0.0
    %v268 = vmin.f32 %v260, 0.0
    %v269 = vmin.f32 %v263, 0.0
    %v270 = vmul.f32 %v268, 1.442695
    %v271 = vpow.pop %v270
    %v272 = vmul.f32 %v269, 1.442695
    %v273 = vpow.pop %v272
    %v274 = vsub.f32 %v271, 1.0
    %v275 = vsub.f32 %v273, 1.0
    %v276 = vsel %vm266, %v260, %v274
    %v277 = vsel %vm267, %v263, %v275
    %v278 = vpack.c.bf16 %v277, %v276
    %v279 = vld [vmem:[#allocation9] sm:$0xf]
    %v280 = vld [vmem:[#allocation9 + $0x4] sm:$0xf]
    %v281 = vld [vmem:[#allocation9 + $0x8] sm:$0xf]
    %v282 = vld [vmem:[#allocation9 + $0xc] sm:$0xf]
    %v283 = vld [vmem:[#allocation9 + $0x10] sm:$0xf]
    %v284 = vld [vmem:[#allocation9 + $0x14] sm:$0xf]
    %v285 = vld [vmem:[#allocation9 + $0x18] sm:$0xf]
    %v286 = vld [vmem:[#allocation9 + $0x1c] sm:$0xf]
    %v287 = vld [vmem:[#allocation9 + $0x20] sm:$0xf]
    %v288 = vld [vmem:[#allocation9 + $0x24] sm:$0xf]
    %v289 = vld [vmem:[#allocation9 + $0x28] sm:$0xf]
    %v290 = vld [vmem:[#allocation9 + $0x2c] sm:$0xf]
    %v291 = vld [vmem:[#allocation9 + $0x30] sm:$0xf]
    %v292 = vld [vmem:[#allocation9 + $0x34] sm:$0xf]
    %v293 = vld [vmem:[#allocation9 + $0x38] sm:$0xf]
    %v294 = vld [vmem:[#allocation9 + $0x3c] sm:$0xf]
    %v295 = vld [vmem:[%s5] sm:$0x1]
    %v297 = vlaneseq
    %v298 = vshrl.u32 %v297, 7
    %v299 = vsub.s32 0, %v298
    %v300 = vrot.slane %v295, %v299
    %v318 = vunpack.c.l.b16 %v279
    %v319 = vunpack.c.l.b16 %v280
    %v320 = vunpack.c.l.b16 %v281
    %v321 = vunpack.c.l.b16 %v282
    %v322 = vunpack.c.l.b16 %v283
    %v323 = vunpack.c.l.b16 %v284
    %v324 = vunpack.c.l.b16 %v285
    %v325 = vunpack.c.l.b16 %v286
    %v326 = vunpack.c.l.b16 %v287
    %v327 = vunpack.c.l.b16 %v288
    %v328 = vunpack.c.l.b16 %v289
    %v329 = vunpack.c.l.b16 %v290
    %v330 = vunpack.c.l.b16 %v291
    %v331 = vunpack.c.l.b16 %v292
    %v332 = vunpack.c.l.b16 %v293
    %v333 = vunpack.c.l.b16 %v294
    %v334 = vpack.c.b16 %v319, %v318
    %v335 = vpack.c.b16 %v321, %v320
    %v336 = vpack.c.b16 %v323, %v322
    %v337 = vpack.c.b16 %v325, %v324
    %v338 = vpack.c.b16 %v327, %v326
    %v339 = vpack.c.b16 %v329, %v328
    %v340 = vpack.c.b16 %v331, %v330
    %v341 = vpack.c.b16 %v333, %v332
    %350 = vmatprep.subr.bf16.mxu0 0
    %351 = vmatpush1.bf16.msra.mxu0 %v341
    %352 = vmatprep.subr.bf16.mxu0 0
    %353 = vmatpush1.bf16.msra.mxu0 %v340
    %354 = vmatprep.subr.bf16.mxu0 0
    %355 = vmatpush1.bf16.msra.mxu0 %v339
    %356 = vmatprep.subr.bf16.mxu0 0
    %357 = vmatpush1.bf16.msra.mxu0 %v338
    %358 = vmatprep.subr.bf16.mxu0 0
    %359 = vmatpush1.bf16.msra.mxu0 %v337
    %360 = vmatprep.subr.bf16.mxu0 0
    %361 = vmatpush1.bf16.msra.mxu0 %v336
    %362 = vmatprep.subr.bf16.mxu0 0
    %363 = vmatpush1.bf16.msra.mxu0 %v335
    %364 = vmatprep.subr.bf16.mxu0 0
    %365 = vmatpush1.bf16.msra.mxu0 %v334
    %366 = vmatprep.subr.bf16.mxu0 0
    %367 = vmatpush2.bf16.msra.mxu0 0
    %368 = vmatprep.subr.bf16.mxu0 0
    %369 = vmatpush2.bf16.msra.mxu0 0
    %370 = vmatprep.subr.bf16.mxu0 0
    %371 = vmatpush2.bf16.msra.mxu0 0
    %372 = vmatprep.subr.bf16.mxu0 0
    %373 = vmatpush2.bf16.msra.mxu0 0
    %374 = vmatprep.subr.bf16.mxu0 0
    %375 = vmatpush2.bf16.msra.mxu0 0
    %376 = vmatprep.subr.bf16.mxu0 0
    %377 = vmatpush2.bf16.msra.mxu0 0
    %378 = vmatprep.subr.bf16.mxu0 0
    %379 = vmatpush2.bf16.msra.mxu0 0
    %380 = vmatprep.subr.bf16.mxu0 0
    %381 = vmatpush2.bf16.msra.mxu0 0
    %382 = vmatprep.mubr.bf16.mxu0 0
    %383 = vmatmul.mubr.bf16.gmra.mxu0 %v278
    %v384 = vpop.f32.mrf.mxu0
    %v385 = vadd.f32 %v300, %v384
    %v386 = vpop.f32.mrf.mxu0
    %v387 = vpop.f32.mrf.mxu0
    %v388 = vadd.f32 %v300, %v387
    %v389 = vpop.f32.mrf.mxu0
    %390 = vdwg.mxu0
    %vm391 = vcmp.gt.f32.partialorder %v385, 0.0
    %vm392 = vcmp.gt.f32.partialorder %v388, 0.0
    %v393 = vmin.f32 %v385, 0.0
    %v394 = vmin.f32 %v388, 0.0
    %v395 = vmul.f32 %v393, 1.442695
    %v396 = vpow.pop %v395
    %v397 = vmul.f32 %v394, 1.442695
    %v398 = vpow.pop %v397
    %v399 = vsub.f32 %v396, 1.0
    %v400 = vsub.f32 %v398, 1.0
    %v401 = vsel %vm391, %v385, %v399
    %v402 = vsel %vm392, %v388, %v400
    %v403 = vpack.c.bf16 %v402, %v401
    %v404 = vld [vmem:[#allocation14] sm:$0xf]
    %v405 = vld [vmem:[#allocation14 + $0x4] sm:$0xf]
    %v406 = vld [vmem:[#allocation14 + $0x8] sm:$0xf]
    %v407 = vld [vmem:[#allocation14 + $0xc] sm:$0xf]
    %v408 = vld [vmem:[#allocation14 + $0x10] sm:$0xf]
    %v409 = vld [vmem:[#allocation14 + $0x14] sm:$0xf]
    %v410 = vld [vmem:[#allocation14 + $0x18] sm:$0xf]
    %v411 = vld [vmem:[#allocation14 + $0x1c] sm:$0xf]
    %v412 = vld [vmem:[#allocation14 + $0x20] sm:$0xf]
    %v413 = vld [vmem:[#allocation14 + $0x24] sm:$0xf]
    %v414 = vld [vmem:[#allocation14 + $0x28] sm:$0xf]
    %v415 = vld [vmem:[#allocation14 + $0x2c] sm:$0xf]
    %v416 = vld [vmem:[#allocation14 + $0x30] sm:$0xf]
    %v417 = vld [vmem:[#allocation14 + $0x34] sm:$0xf]
    %v418 = vld [vmem:[#allocation14 + $0x38] sm:$0xf]
    %v419 = vld [vmem:[#allocation14 + $0x3c] sm:$0xf]
    %v420 = vld [vmem:[%s11] sm:$0x1]
    %v422 = vlaneseq
    %v423 = vshrl.u32 %v422, 7
    %v424 = vsub.s32 0, %v423
    %v425 = vrot.slane %v420, %v424
    %v443 = vunpack.c.l.b16 %v404
    %v444 = vunpack.c.l.b16 %v405
    %v445 = vunpack.c.l.b16 %v406
    %v446 = vunpack.c.l.b16 %v407
    %v447 = vunpack.c.l.b16 %v408
    %v448 = vunpack.c.l.b16 %v409
    %v449 = vunpack.c.l.b16 %v410
    %v450 = vunpack.c.l.b16 %v411
    %v451 = vunpack.c.l.b16 %v412
    %v452 = vunpack.c.l.b16 %v413
    %v453 = vunpack.c.l.b16 %v414
    %v454 = vunpack.c.l.b16 %v415
    %v455 = vunpack.c.l.b16 %v416
    %v456 = vunpack.c.l.b16 %v417
    %v457 = vunpack.c.l.b16 %v418
    %v458 = vunpack.c.l.b16 %v419
    %v459 = vpack.c.b16 %v444, %v443
    %v460 = vpack.c.b16 %v446, %v445
    %v461 = vpack.c.b16 %v448, %v447
    %v462 = vpack.c.b16 %v450, %v449
    %v463 = vpack.c.b16 %v452, %v451
    %v464 = vpack.c.b16 %v454, %v453
    %v465 = vpack.c.b16 %v456, %v455
    %v466 = vpack.c.b16 %v458, %v457
    %475 = vmatprep.subr.bf16.mxu0 0
    %476 = vmatpush1.bf16.msra.mxu0 %v466
    %477 = vmatprep.subr.bf16.mxu0 0
    %478 = vmatpush1.bf16.msra.mxu0 %v465
    %479 = vmatprep.subr.bf16.mxu0 0
    %480 = vmatpush1.bf16.msra.mxu0 %v464
    %481 = vmatprep.subr.bf16.mxu0 0
    %482 = vmatpush1.bf16.msra.mxu0 %v463
    %483 = vmatprep.subr.bf16.mxu0 0
    %484 = vmatpush1.bf16.msra.mxu0 %v462
    %485 = vmatprep.subr.bf16.mxu0 0
    %486 = vmatpush1.bf16.msra.mxu0 %v461
    %487 = vmatprep.subr.bf16.mxu0 0
    %488 = vmatpush1.bf16.msra.mxu0 %v460
    %489 = vmatprep.subr.bf16.mxu0 0
    %490 = vmatpush1.bf16.msra.mxu0 %v459
    %491 = vmatprep.subr.bf16.mxu0 0
    %492 = vmatpush2.bf16.msra.mxu0 0
    %493 = vmatprep.subr.bf16.mxu0 0
    %494 = vmatpush2.bf16.msra.mxu0 0
    %495 = vmatprep.subr.bf16.mxu0 0
    %496 = vmatpush2.bf16.msra.mxu0 0
    %497 = vmatprep.subr.bf16.mxu0 0
    %498 = vmatpush2.bf16.msra.mxu0 0
    %499 = vmatprep.subr.bf16.mxu0 0
    %500 = vmatpush2.bf16.msra.mxu0 0
    %501 = vmatprep.subr.bf16.mxu0 0
    %502 = vmatpush2.bf16.msra.mxu0 0
    %503 = vmatprep.subr.bf16.mxu0 0
    %504 = vmatpush2.bf16.msra.mxu0 0
    %505 = vmatprep.subr.bf16.mxu0 0
    %506 = vmatpush2.bf16.msra.mxu0 0
    %507 = vmatprep.mubr.bf16.mxu0 0
    %508 = vmatmul.mubr.bf16.gmra.mxu0 %v403
    %v509 = vpop.f32.mrf.mxu0
    %v510 = vadd.f32 %v425, %v509
    %v511 = vpop.f32.mrf.mxu0
    %v512 = vpop.f32.mrf.mxu0
    %v513 = vadd.f32 %v425, %v512
    %v514 = vpop.f32.mrf.mxu0
    %515 = vdwg.mxu0
    %516 = vst [vmem:[#allocation15] sm:$0xff] %v510
    %517 = vst [vmem:[#allocation15 + $0x10] sm:$0xff] %v513
    %v518 = vld [vmem:[#allocation6] sm:$0xf]
    %v519 = vld [vmem:[#allocation6 + $0x4] sm:$0xf]
    %v520 = vld [vmem:[#allocation11] sm:$0xf]
    %v521 = vld [vmem:[#allocation11 + $0x4] sm:$0xf]
    %v522 = vld [vmem:[#allocation11 + $0x8] sm:$0xf]
    %v523 = vld [vmem:[#allocation11 + $0xc] sm:$0xf]
    %v524 = vld [vmem:[#allocation11 + $0x10] sm:$0xf]
    %v525 = vld [vmem:[#allocation11 + $0x14] sm:$0xf]
    %v526 = vld [vmem:[#allocation11 + $0x18] sm:$0xf]
    %v527 = vld [vmem:[#allocation11 + $0x1c] sm:$0xf]
    %v528 = vld [vmem:[#allocation11 + $0x20] sm:$0xf]
    %v529 = vld [vmem:[#allocation11 + $0x24] sm:$0xf]
    %v530 = vld [vmem:[#allocation11 + $0x28] sm:$0xf]
    %v531 = vld [vmem:[#allocation11 + $0x2c] sm:$0xf]
    %v532 = vld [vmem:[#allocation11 + $0x30] sm:$0xf]
    %v533 = vld [vmem:[#allocation11 + $0x34] sm:$0xf]
    %v534 = vld [vmem:[#allocation11 + $0x38] sm:$0xf]
    %v535 = vld [vmem:[#allocation11 + $0x3c] sm:$0xf]
    %v536 = vld [vmem:[%s7] sm:$0x1]
    %v538 = vlaneseq
    %v539 = vshrl.u32 %v538, 7
    %v540 = vsub.s32 0, %v539
    %v541 = vrot.slane %v536, %v540
    %v545 = vunpack.c.l.b16 %v518
    %v546 = vunpack.c.l.b16 %v519
    %v547 = vpack.c.b16 %v546, %v545
    %v565 = vunpack.c.l.b16 %v520
    %v566 = vunpack.c.l.b16 %v521
    %v567 = vunpack.c.l.b16 %v522
    %v568 = vunpack.c.l.b16 %v523
    %v569 = vunpack.c.l.b16 %v524
    %v570 = vunpack.c.l.b16 %v525
    %v571 = vunpack.c.l.b16 %v526
    %v572 = vunpack.c.l.b16 %v527
    %v573 = vunpack.c.l.b16 %v528
    %v574 = vunpack.c.l.b16 %v529
    %v575 = vunpack.c.l.b16 %v530
    %v576 = vunpack.c.l.b16 %v531
    %v577 = vunpack.c.l.b16 %v532
    %v578 = vunpack.c.l.b16 %v533
    %v579 = vunpack.c.l.b16 %v534
    %v580 = vunpack.c.l.b16 %v535
    %v581 = vpack.c.b16 %v566, %v565
    %v582 = vpack.c.b16 %v568, %v567
    %v583 = vpack.c.b16 %v570, %v569
    %v584 = vpack.c.b16 %v572, %v571
    %v585 = vpack.c.b16 %v574, %v573
    %v586 = vpack.c.b16 %v576, %v575
    %v587 = vpack.c.b16 %v578, %v577
    %v588 = vpack.c.b16 %v580, %v579
    %597 = vmatprep.subr.bf16.mxu0 0
    %598 = vmatpush1.bf16.msra.mxu0 %v588
    %599 = vmatprep.subr.bf16.mxu0 0
    %600 = vmatpush1.bf16.msra.mxu0 %v587
    %601 = vmatprep.subr.bf16.mxu0 0
    %602 = vmatpush1.bf16.msra.mxu0 %v586
    %603 = vmatprep.subr.bf16.mxu0 0
    %604 = vmatpush1.bf16.msra.mxu0 %v585
    %605 = vmatprep.subr.bf16.mxu0 0
    %606 = vmatpush1.bf16.msra.mxu0 %v584
    %607 = vmatprep.subr.bf16.mxu0 0
    %608 = vmatpush1.bf16.msra.mxu0 %v583
    %609 = vmatprep.subr.bf16.mxu0 0
    %610 = vmatpush1.bf16.msra.mxu0 %v582
    %611 = vmatprep.subr.bf16.mxu0 0
    %612 = vmatpush1.bf16.msra.mxu0 %v581
    %613 = vmatprep.subr.bf16.mxu0 0
    %614 = vmatpush2.bf16.msra.mxu0 0
    %615 = vmatprep.subr.bf16.mxu0 0
    %616 = vmatpush2.bf16.msra.mxu0 0
    %617 = vmatprep.subr.bf16.mxu0 0
    %618 = vmatpush2.bf16.msra.mxu0 0
    %619 = vmatprep.subr.bf16.mxu0 0
    %620 = vmatpush2.bf16.msra.mxu0 0
    %621 = vmatprep.subr.bf16.mxu0 0
    %622 = vmatpush2.bf16.msra.mxu0 0
    %623 = vmatprep.subr.bf16.mxu0 0
    %624 = vmatpush2.bf16.msra.mxu0 0
    %625 = vmatprep.subr.bf16.mxu0 0
    %626 = vmatpush2.bf16.msra.mxu0 0
    %627 = vmatprep.subr.bf16.mxu0 0
    %628 = vmatpush2.bf16.msra.mxu0 0
    %629 = vmatprep.mubr.bf16.mxu0 0
    %630 = vmatmul.mubr.bf16.gmra.mxu0 %v547
    %v631 = vpop.f32.mrf.mxu0
    %v632 = vadd.f32 %v541, %v631
    %v633 = vpop.f32.mrf.mxu0
    %v634 = vpop.f32.mrf.mxu0
    %v635 = vadd.f32 %v541, %v634
    %v636 = vpop.f32.mrf.mxu0
    %637 = vdwg.mxu0
    %vm638 = vcmp.gt.f32.partialorder %v632, 0.0
    %vm639 = vcmp.gt.f32.partialorder %v635, 0.0
    %v640 = vmin.f32 %v632, 0.0
    %v641 = vmin.f32 %v635, 0.0
    %v642 = vmul.f32 %v640, 1.442695
    %v643 = vpow.pop %v642
    %v644 = vmul.f32 %v641, 1.442695
    %v645 = vpow.pop %v644
    %v646 = vsub.f32 %v643, 1.0
    %v647 = vsub.f32 %v645, 1.0
    %v648 = vsel %vm638, %v632, %v646
    %v649 = vsel %vm639, %v635, %v647
    %v650 = vpack.c.bf16 %v649, %v648
    %v651 = vld [vmem:[#allocation12] sm:$0xf]
    %v652 = vld [vmem:[#allocation12 + $0x4] sm:$0xf]
    %v653 = vld [vmem:[#allocation12 + $0x8] sm:$0xf]
    %v654 = vld [vmem:[#allocation12 + $0xc] sm:$0xf]
    %v655 = vld [vmem:[#allocation12 + $0x10] sm:$0xf]
    %v656 = vld [vmem:[#allocation12 + $0x14] sm:$0xf]
    %v657 = vld [vmem:[#allocation12 + $0x18] sm:$0xf]
    %v658 = vld [vmem:[#allocation12 + $0x1c] sm:$0xf]
    %v659 = vld [vmem:[#allocation12 + $0x20] sm:$0xf]
    %v660 = vld [vmem:[#allocation12 + $0x24] sm:$0xf]
    %v661 = vld [vmem:[#allocation12 + $0x28] sm:$0xf]
    %v662 = vld [vmem:[#allocation12 + $0x2c] sm:$0xf]
    %v663 = vld [vmem:[#allocation12 + $0x30] sm:$0xf]
    %v664 = vld [vmem:[#allocation12 + $0x34] sm:$0xf]
    %v665 = vld [vmem:[#allocation12 + $0x38] sm:$0xf]
    %v666 = vld [vmem:[#allocation12 + $0x3c] sm:$0xf]
    %v667 = vld [vmem:[%s9] sm:$0x1]
    %v669 = vlaneseq
    %v670 = vshrl.u32 %v669, 7
    %v671 = vsub.s32 0, %v670
    %v672 = vrot.slane %v667, %v671
    %v690 = vunpack.c.l.b16 %v651
    %v691 = vunpack.c.l.b16 %v652
    %v692 = vunpack.c.l.b16 %v653
    %v693 = vunpack.c.l.b16 %v654
    %v694 = vunpack.c.l.b16 %v655
    %v695 = vunpack.c.l.b16 %v656
    %v696 = vunpack.c.l.b16 %v657
    %v697 = vunpack.c.l.b16 %v658
    %v698 = vunpack.c.l.b16 %v659
    %v699 = vunpack.c.l.b16 %v660
    %v700 = vunpack.c.l.b16 %v661
    %v701 = vunpack.c.l.b16 %v662
    %v702 = vunpack.c.l.b16 %v663
    %v703 = vunpack.c.l.b16 %v664
    %v704 = vunpack.c.l.b16 %v665
    %v705 = vunpack.c.l.b16 %v666
    %v706 = vpack.c.b16 %v691, %v690
    %v707 = vpack.c.b16 %v693, %v692
    %v708 = vpack.c.b16 %v695, %v694
    %v709 = vpack.c.b16 %v697, %v696
    %v710 = vpack.c.b16 %v699, %v698
    %v711 = vpack.c.b16 %v701, %v700
    %v712 = vpack.c.b16 %v703, %v702
    %v713 = vpack.c.b16 %v705, %v704
    %722 = vmatprep.subr.bf16.mxu0 0
    %723 = vmatpush1.bf16.msra.mxu0 %v713
    %724 = vmatprep.subr.bf16.mxu0 0
    %725 = vmatpush1.bf16.msra.mxu0 %v712
    %726 = vmatprep.subr.bf16.mxu0 0
    %727 = vmatpush1.bf16.msra.mxu0 %v711
    %728 = vmatprep.subr.bf16.mxu0 0
    %729 = vmatpush1.bf16.msra.mxu0 %v710
    %730 = vmatprep.subr.bf16.mxu0 0
    %731 = vmatpush1.bf16.msra.mxu0 %v709
    %732 = vmatprep.subr.bf16.mxu0 0
    %733 = vmatpush1.bf16.msra.mxu0 %v708
    %734 = vmatprep.subr.bf16.mxu0 0
    %735 = vmatpush1.bf16.msra.mxu0 %v707
    %736 = vmatprep.subr.bf16.mxu0 0
    %737 = vmatpush1.bf16.msra.mxu0 %v706
    %738 = vmatprep.subr.bf16.mxu0 0
    %739 = vmatpush2.bf16.msra.mxu0 0
    %740 = vmatprep.subr.bf16.mxu0 0
    %741 = vmatpush2.bf16.msra.mxu0 0
    %742 = vmatprep.subr.bf16.mxu0 0
    %743 = vmatpush2.bf16.msra.mxu0 0
    %744 = vmatprep.subr.bf16.mxu0 0
    %745 = vmatpush2.bf16.msra.mxu0 0
    %746 = vmatprep.subr.bf16.mxu0 0
    %747 = vmatpush2.bf16.msra.mxu0 0
    %748 = vmatprep.subr.bf16.mxu0 0
    %749 = vmatpush2.bf16.msra.mxu0 0
    %750 = vmatprep.subr.bf16.mxu0 0
    %751 = vmatpush2.bf16.msra.mxu0 0
    %752 = vmatprep.subr.bf16.mxu0 0
    %753 = vmatpush2.bf16.msra.mxu0 0
    %754 = vmatprep.mubr.bf16.mxu0 0
    %755 = vmatmul.mubr.bf16.gmra.mxu0 %v650
    %v756 = vpop.f32.mrf.mxu0
    %v757 = vadd.f32 %v672, %v756
    %v758 = vpop.f32.mrf.mxu0
    %v759 = vpop.f32.mrf.mxu0
    %v760 = vadd.f32 %v672, %v759
    %v761 = vpop.f32.mrf.mxu0
    %762 = vdwg.mxu0
    %vm763 = vcmp.gt.f32.partialorder %v757, 0.0
    %vm764 = vcmp.gt.f32.partialorder %v760, 0.0
    %v765 = vmin.f32 %v757, 0.0
    %v766 = vmin.f32 %v760, 0.0
    %v767 = vmul.f32 %v765, 1.442695
    %v768 = vpow.pop %v767
    %v769 = vmul.f32 %v766, 1.442695
    %v770 = vpow.pop %v769
    %v771 = vsub.f32 %v768, 1.0
    %v772 = vsub.f32 %v770, 1.0
    %v773 = vsel %vm763, %v757, %v771
    %v774 = vsel %vm764, %v760, %v772
    %v775 = vpack.c.bf16 %v774, %v773
    %v776 = vunpack.c.l.bf16 %v775
    %v777 = vunpack.c.h.bf16 %v775
    %v778 = vld [vmem:[%s12] sm:$0x1]
    %v780 = vlaneseq
    %v781 = vshrl.u32 %v780, 7
    %v782 = vsub.s32 0, %v781
    %v783 = vrot.slane %v778, %v782
    %v785 = vmul.f32 %v776, %v783
    %v786 = vmul.f32 %v777, %v783
    %787 = vadd.xlane.f32.xlu0 %v785
    %v788 = vpop.xlane.xlu0 %787
    %789 = vadd.xlane.f32.xlu0 %v786
    %v790 = vpop.xlane.xlu0 %789
    %v791 = vld [vmem:[#allocation2] sm:$0x1]
    %v793 = vlaneseq
    %v794 = vshrl.u32 %v793, 7
    %v795 = vsub.s32 0, %v794
    %v796 = vrot.slane %v791, %v795
    %v798 = vadd.f32 %v788, %v796
    %v799 = vadd.f32 %v790, %v796
    %v800 = vlaneseq
    %v801 = vand.u32 %v800, 127
    %vm802 = vcmp.eq.s32.totalorder %v801, 0
    %804 = vset.pattern.permute.xlu0 0
    %805 = vperm.xlu0 %804, %v798
    %v806 = vpop.permute.xlu0 %805
    %809 = vset.pattern.permute.xlu0 0
    %810 = vperm.xlu0 %809, %v799
    %v811 = vpop.permute.xlu0 %810
    %v813 = vsel %vm802, %v806, 0.0
    %v814 = vsel %vm802, %v811, 0.0
    %815 = vst [vmem:[#allocation15 + $0x8] sm:$0xff] %v813
    %816 = vst [vmem:[#allocation15 + $0x18] sm:$0xff] %v814
    // Predicated region
    $region86: #{tpu_custom_call.1} parent=1 // pred_check
      _
    $region87: #{tpu_custom_call.1} parent=1 // pred_check_branch
      %818 = sbr.rel (0) target = $region89
    $region88: #{tpu_custom_call.1} parent=1 // pred_region
      %s820 = ssub.s32 512, 512
      %821 = vsyncadd [#allocation5], %s820
      %s822 = sshll.u32 [#allocation15], 4
      %s823 = int_to_ptr.vmem [resolvable:$true] %s822
      %828 = dma.vmem_to_hbm [thread:$0]  %s823, 512, %s14, [#allocation5], 256, 256, 16
    $region89: #{tpu_custom_call.1} parent=1 // pred_fallthru
      _
    // Predicated region
    $region90: #{tpu_custom_call.1} parent=1 // pred_check
      _
    $region91: #{tpu_custom_call.1} parent=1 // pred_check_branch
      %830 = sbr.rel (0) target = $region93
    $region92: #{tpu_custom_call.1} parent=1 // pred_region
      %831 = dma.done [#allocation5], 512
    $region93: #{tpu_custom_call.1} parent=1 // pred_fallthru
      _
    %832 = vsyncpa [#allocation4], 1
    %833 = vsyncpa [#allocation7], 1
    %834 = vsyncpa [#allocation10], 1
    %835 = vsyncpa [#allocation13], 1
    %836 = vsyncpa [#allocation5], 1

// kernel: tpu_custom_call.1
$region0: #{tpu_custom_call.1}
  #allocation0 [shape = 'u32[]', space=smem, size = 0x4, offset = 0x4, fixed_abs, tag = 'smem constant byte address 0x4 - core index']
  #allocation1 [shape = 'u32[144,128]{1,0:T(1,128)}', space=vmem, size = 0x12000, scoped, tag = 'internal scratch']
  #allocation2 [shape = 'f32[1,1]{1,0:T(1,128)S(1)}', space=vmem, size = 0x200, scoped, tag = 'scoped memory for tpu_custom_call.1']
  %s0 = inlined_call_operand.hbm [shape: bf16[16,128], index: 0, kind: input, shape index: {}]
  %s1 = inlined_call_operand.hbm [shape: bf16[16,128], index: 1, kind: input, shape index: {}]
  %s2 = inlined_call_operand.hbm [shape: bf16[128,128], index: 2, kind: input, shape index: {}]
  %s3 = inlined_call_operand.vmem [shape: f32[1,128], index: 3, kind: input, shape index: {}]
  %s4 = inlined_call_operand.hbm [shape: bf16[128,128], index: 4, kind: input, shape index: {}]
  %s5 = inlined_call_operand.vmem [shape: f32[1,128], index: 5, kind: input, shape index: {}]
  %s6 = inlined_call_operand.hbm [shape: bf16[128,128], index: 6, kind: input, shape index: {}]
  %s7 = inlined_call_operand.vmem [shape: f32[1,128], index: 7, kind: input, shape index: {}]
  %s8 = inlined_call_operand.hbm [shape: bf16[128,128], index: 8, kind: input, shape index: {}]
  %s9 = inlined_call_operand.vmem [shape: f32[1,128], index: 9, kind: input, shape index: {}]
  %s10 = inlined_call_operand.hbm [shape: bf16[128,128], index: 10, kind: input, shape index: {}]
  %s11 = inlined_call_operand.vmem [shape: f32[1,128], index: 11, kind: input, shape index: {}]
  %s12 = inlined_call_operand.vmem [shape: f32[1,128], index: 12, kind: input, shape index: {}]
  %s13 = inlined_call_operand.<no memory space> [shape: f32[1,1], index: 13, kind: input, shape index: {}]
  %s14 = inlined_call_operand.hbm [shape: f32[16,256], index: 14, kind: output, shape index: {}]
  %s15 = sld [smem:[#allocation0]]
  $region94: #{tpu_custom_call.1} parent=0
    _
  %s17 = ssub.s32 1, %s15
  %s18 = scalar_select 0, %s17, %s15
  %v19 = vstv %s13
  %20 = vst [vmem:[#allocation2] sm:$0x1] %v19
  $region1: #{tpu_custom_call.1} parent=0
    #allocation3 [shape = 'u8[4096]{0}', space=vmem, size = 0x1000, scoped, tag = 'input window, operand 0, single buffered']
    #allocation4 [shape = 's32[1]{0}', space=sflag, size = 0x4, scoped, tag = 'scoped memory for tpu_custom_call.1']
    #allocation5 [shape = 's32[1]{0}', space=sflag, size = 0x4, scoped, tag = 'scoped memory for tpu_custom_call.1']
    #allocation6 [shape = 'u8[4096]{0}', space=vmem, size = 0x1000, scoped, tag = 'input window, operand 1, single buffered']
    #allocation7 [shape = 's32[1]{0}', space=sflag, size = 0x4, scoped, tag = 'scoped memory for tpu_custom_call.1']
    #allocation8 [shape = 'u8[32768]{0}', space=vmem, size = 0x8000, scoped, tag = 'input window, operand 2, single buffered']
    #allocation9 [shape = 'u8[32768]{0}', space=vmem, size = 0x8000, scoped, tag = 'input window, operand 4, single buffered']
    #allocation10 [shape = 's32[1]{0}', space=sflag, size = 0x4, scoped, tag = 'scoped memory for tpu_custom_call.1']
    #allocation11 [shape = 'u8[32768]{0}', space=vmem, size = 0x8000, scoped, tag = 'input window, operand 6, single buffered']
    #allocation12 [shape = 'u8[32768]{0}', space=vmem, size = 0x8000, scoped, tag = 'input window, operand 8, single buffered']
    #allocation13 [shape = 's32[1]{0}', space=sflag, size = 0x4, scoped, tag = 'scoped memory for tpu_custom_call.1']
    #allocation14 [shape = 'u8[32768]{0}', space=vmem, size = 0x8000, scoped, tag = 'input window, operand 10, single buffered']
    #allocation15 [shape = 'u8[16384]{0}', space=vmem, size = 0x4000, scoped, tag = 'output window, operand 0, single buffered']
    %21 = vsyncpa [#allocation4], 0
    %22 = vsyncpa [#allocation7], 0
    %23 = vsyncpa [#allocation10], 0
    %24 = vsyncpa [#allocation13], 0
    %25 = vsyncpa [#allocation5], 0
    // Predicated region
    $region2: #{tpu_custom_call.1} parent=1 // pred_check
      _
    $region3: #{tpu_custom_call.1} parent=1 // pred_check_branch
      %27 = sbr.rel (0) target = $region5
    $region4: #{tpu_custom_call.1} parent=1 // pred_region
      %s29 = ssub.s32 128, 128
      %30 = vsyncadd [#allocation4], %s29
      %s31 = sshll.u32 [#allocation3], 4
      %s32 = int_to_ptr.vmem [resolvable:$true] %s31
      %37 = dma.hbm_to_vmem [thread:$0]  %s0, 128, %s32, [#allocation4], 64, 64, 4
    $region5: #{tpu_custom_call.1} parent=1 // pred_fallthru
      _
    // Predicated region
    $region6: #{tpu_custom_call.1} parent=1 // pred_check
      _
    $region7: #{tpu_custom_call.1} parent=1 // pred_check_branch
      %39 = sbr.rel (0) target = $region9
    $region8: #{tpu_custom_call.1} parent=1 // pred_region
      %s41 = ssub.s32 128, 128
      %42 = vsyncadd [#allocation7], %s41
      %s43 = sshll.u32 [#allocation6], 4
      %s44 = int_to_ptr.vmem [resolvable:$true] %s43
      %49 = dma.hbm_to_vmem [thread:$0]  %s1, 128, %s44, [#allocation7], 64, 64, 4
    $region9: #{tpu_custom_call.1} parent=1 // pred_fallthru
      _
    // Predicated region
    $region10: #{tpu_custom_call.1} parent=1 // pred_check
      _
    $region11: #{tpu_custom_call.1} parent=1 // pred_check_branch
      %51 = sbr.rel (0) target = $region13
    $region12: #{tpu_custom_call.1} parent=1 // pred_region
      %s53 = ssub.s32 1024, 1024
      %54 = vsyncadd [#allocation7], %s53
      %s55 = sshll.u32 [#allocation8], 4
      %s56 = int_to_ptr.vmem [resolvable:$true] %s55
      %61 = dma.hbm_to_vmem [thread:$0]  %s2, 1024, %s56, [#allocation7], 64, 64, 4
    $region13: #{tpu_custom_call.1} parent=1 // pred_fallthru
      _
    // Predicated region
    $region14: #{tpu_custom_call.1} parent=1 // pred_check
      _
    $region15: #{tpu_custom_call.1} parent=1 // pred_check_branch
      %63 = sbr.rel (0) target = $region17
    $region16: #{tpu_custom_call.1} parent=1 // pred_region
      _
    $region17: #{tpu_custom_call.1} parent=1 // pred_fallthru
      _
    // Predicated region
    $region18: #{tpu_custom_call.1} parent=1 // pred_check
      _
    $region19: #{tpu_custom_call.1} parent=1 // pred_check_branch
      %65 = sbr.rel (0) target = $region21
    $region20: #{tpu_custom_call.1} parent=1 // pred_region
      %s67 = ssub.s32 1024, 1024
      %68 = vsyncadd [#allocation10], %s67
      %s69 = sshll.u32 [#allocation9], 4
      %s70 = int_to_ptr.vmem [resolvable:$true] %s69
      %75 = dma.hbm_to_vmem [thread:$0]  %s4, 1024, %s70, [#allocation10], 64, 64, 4
    $region21: #{tpu_custom_call.1} parent=1 // pred_fallthru
      _
    // Predicated region
    $region22: #{tpu_custom_call.1} parent=1 // pred_check
      _
    $region23: #{tpu_custom_call.1} parent=1 // pred_check_branch
      %77 = sbr.rel (0) target = $region25
    $region24: #{tpu_custom_call.1} parent=1 // pred_region
      _
    $region25: #{tpu_custom_call.1} parent=1 // pred_fallthru
      _
    // Predicated region
    $region26: #{tpu_custom_call.1} parent=1 // pred_check
      _
    $region27: #{tpu_custom_call.1} parent=1 // pred_check_branch
      %79 = sbr.rel (0) target = $region29
    $region28: #{tpu_custom_call.1} parent=1 // pred_region
      %s81 = ssub.s32 1024, 1024
      %82 = vsyncadd [#allocation10], %s81
      %s83 = sshll.u32 [#allocation11], 4
      %s84 = int_to_ptr.vmem [resolvable:$true] %s83
      %89 = dma.hbm_to_vmem [thread:$0]  %s6, 1024, %s84, [#allocation10], 64, 64, 4
    $region29: #{tpu_custom_call.1} parent=1 // pred_fallthru
      _
    // Predicated region
    $region30: #{tpu_custom_call.1} parent=1 // pred_check
      _
    $region31: #{tpu_custom_call.1} parent=1 // pred_check_branch
      %91 = sbr.rel (0) target = $region33
    $region32: #{tpu_custom_call.1} parent=1 // pred_region
      _
    $region33: #{tpu_custom_call.1} parent=1 // pred_fallthru
      _
    // Predicated region
    $region34: #{tpu_custom_call.1} parent=1 // pred_check
      _
    $region35: #{tpu_custom_call.1} parent=1 // pred_check_branch
      %93 = sbr.rel (0) target = $region37
    $region36: #{tpu_custom_call.1} parent=1 // pred_region
      %s95 = ssub.s32 1024, 1024
      %96 = vsyncadd [#allocation13], %s95
      %s97 = sshll.u32 [#allocation12], 4
      %s98 = int_to_ptr.vmem [resolvable:$true] %s97
      %103 = dma.hbm_to_vmem [thread:$0]  %s8, 1024, %s98, [#allocation13], 64, 64, 4
    $region37: #{tpu_custom_call.1} parent=1 // pred_fallthru
      _
    // Predicated region
    $region38: #{tpu_custom_call.1} parent=1 // pred_check
      _
    $region39: #{tpu_custom_call.1} parent=1 // pred_check_branch
      %105 = sbr.rel (0) target = $region41
    $region40: #{tpu_custom_call.1} parent=1 // pred_region
      _
    $region41: #{tpu_custom_call.1} parent=1 // pred_fallthru
      _
    // Predicated region
    $region42: #{tpu_custom_call.1} parent=1 // pred_check
      _
    $region43: #{tpu_custom_call.1} parent=1 // pred_check_branch
      %107 = sbr.rel (0) target = $region45
    $region44: #{tpu_custom_call.1} parent=1 // pred_region
      %s109 = ssub.s32 1024, 1024
      %110 = vsyncadd [#allocation13], %s109
      %s111 = sshll.u32 [#allocation14], 4
      %s112 = int_to_ptr.vmem [resolvable:$true] %s111
      %117 = dma.hbm_to_vmem [thread:$0]  %s10, 1024, %s112, [#allocation13], 64, 64, 4
    $region45: #{tpu_custom_call.1} parent=1 // pred_fallthru
      _
    // Predicated region
    $region46: #{tpu_custom_call.1} parent=1 // pred_check
      _
    $region47: #{tpu_custom_call.1} parent=1 // pred_check_branch
      %119 = sbr.rel (0) target = $region49
    $region48: #{tpu_custom_call.1} parent=1 // pred_region
      _
    $region49: #{tpu_custom_call.1} parent=1 // pred_fallthru
      _
    // Predicated region
    $region50: #{tpu_custom_call.1} parent=1 // pred_check
      _
    $region51: #{tpu_custom_call.1} parent=1 // pred_check_branch
      %121 = sbr.rel (0) target = $region53
    $region52: #{tpu_custom_call.1} parent=1 // pred_region
      _
    $region53: #{tpu_custom_call.1} parent=1 // pred_fallthru
      _
    // Predicated region
    $region54: #{tpu_custom_call.1} parent=1 // pred_check
      _
    $region55: #{tpu_custom_call.1} parent=1 // pred_check_branch
      %123 = sbr.rel (0) target = $region57
    $region56: #{tpu_custom_call.1} parent=1 // pred_region
      _
    $region57: #{tpu_custom_call.1} parent=1 // pred_fallthru
      _
    // Predicated region
    $region58: #{tpu_custom_call.1} parent=1 // pred_check
      _
    $region59: #{tpu_custom_call.1} parent=1 // pred_check_branch
      %125 = sbr.rel (0) target = $region61
    $region60: #{tpu_custom_call.1} parent=1 // pred_region
      %126 = dma.done [#allocation4], 128
    $region61: #{tpu_custom_call.1} parent=1 // pred_fallthru
      _
    // Predicated region
    $region62: #{tpu_custom_call.1} parent=1 // pred_check
      _
    $region63: #{tpu_custom_call.1} parent=1 // pred_check_branch
      %128 = sbr.rel (0) target = $region65
    $region64: #{tpu_custom_call.1} parent=1 // pred_region
      %129 = dma.done [#allocation7], 128
    $region65: #{tpu_custom_call.1} parent=1 // pred_fallthru
      _
    // Predicated region
    $region66: #{tpu_custom_call.1} parent=1 // pred_check
      _
    $region67: #{tpu_custom_call.1} parent=1 // pred_check_branch
      %131 = sbr.rel (0) target = $region69
    $region68: #{tpu_custom_call.1} parent=1 // pred_region
      %132 = dma.done [#allocation7], 1024
    $region69: #{tpu_custom_call.1} parent=1 // pred_fallthru
      _
    // Predicated region
    $region70: #{tpu_custom_call.1} parent=1 // pred_check
      _
    $region71: #{tpu_custom_call.1} parent=1 // pred_check_branch
      %134 = sbr.rel (0) target = $region73
    $region72: #{tpu_custom_call.1} parent=1 // pred_region
      %135 = dma.done [#allocation10], 1024
    $region73: #{tpu_custom_call.1} parent=1 // pred_fallthru
      _
    // Predicated region
    $region74: #{tpu_custom_call.1} parent=1 // pred_check
      _
    $region75: #{tpu_custom_call.1} parent=1 // pred_check_branch
      %137 = sbr.rel (0) target = $region77
    $region76: #{tpu_custom_call.1} parent=1 // pred_region
      %138 = dma.done [#allocation10], 1024
    $region77: #{tpu_custom_call.1} parent=1 // pred_fallthru
      _
    // Predicated region
    $region78: #{tpu_custom_call.1} parent=1 // pred_check
      _
    $region79: #{tpu_custom_call.1} parent=1 // pred_check_branch
      %140 = sbr.rel (0) target = $region81
    $region80: #{tpu_custom_call.1} parent=1 // pred_region
      %141 = dma.done [#allocation13], 1024
    $region81: #{tpu_custom_call.1} parent=1 // pred_fallthru
      _
    // Predicated region
    $region82: #{tpu_custom_call.1} parent=1 // pred_check
      _
    $region83: #{tpu_custom_call.1} parent=1 // pred_check_branch
      %143 = sbr.rel (0) target = $region85
    $region84: #{tpu_custom_call.1} parent=1 // pred_region
      %144 = dma.done [#allocation13], 1024
    $region85: #{tpu_custom_call.1} parent=1 // pred_fallthru
      _
    %v146 = vld [vmem:[#allocation3] sm:$0xf]
    %v147 = vld [vmem:[#allocation3 + $0x4] sm:$0xf]
    %v148 = vld [vmem:[#allocation8] sm:$0xf]
    %v149 = vld [vmem:[#allocation8 + $0x4] sm:$0xf]
    %v150 = vld [vmem:[#allocation8 + $0x8] sm:$0xf]
    %v151 = vld [vmem:[#allocation8 + $0xc] sm:$0xf]
    %v152 = vld [vmem:[#allocation8 + $0x10] sm:$0xf]
    %v153 = vld [vmem:[#allocation8 + $0x14] sm:$0xf]
    %v154 = vld [vmem:[#allocation8 + $0x18] sm:$0xf]
    %v155 = vld [vmem:[#allocation8 + $0x1c] sm:$0xf]
    %v156 = vld [vmem:[#allocation8 + $0x20] sm:$0xf]
    %v157 = vld [vmem:[#allocation8 + $0x24] sm:$0xf]
    %v158 = vld [vmem:[#allocation8 + $0x28] sm:$0xf]
    %v159 = vld [vmem:[#allocation8 + $0x2c] sm:$0xf]
    %v160 = vld [vmem:[#allocation8 + $0x30] sm:$0xf]
    %v161 = vld [vmem:[#allocation8 + $0x34] sm:$0xf]
    %v162 = vld [vmem:[#allocation8 + $0x38] sm:$0xf]
    %v163 = vld [vmem:[#allocation8 + $0x3c] sm:$0xf]
    %v164 = vld [vmem:[%s3] sm:$0x1]
    %v166 = vlaneseq
    %v167 = vshrl.u32 %v166, 7
    %v168 = vsub.s32 0, %v167
    %v169 = vrot.slane %v164, %v168
    %v173 = vunpack.c.l.b16 %v146
    %v174 = vunpack.c.l.b16 %v147
    %v175 = vpack.c.b16 %v174, %v173
    %v193 = vunpack.c.l.b16 %v148
    %v194 = vunpack.c.l.b16 %v149
    %v195 = vunpack.c.l.b16 %v150
    %v196 = vunpack.c.l.b16 %v151
    %v197 = vunpack.c.l.b16 %v152
    %v198 = vunpack.c.l.b16 %v153
    %v199 = vunpack.c.l.b16 %v154
    %v200 = vunpack.c.l.b16 %v155
    %v201 = vunpack.c.l.b16 %v156
    %v202 = vunpack.c.l.b16 %v157
    %v203 = vunpack.c.l.b16 %v158
    %v204 = vunpack.c.l.b16 %v159
    %v205 = vunpack.c.l.b16 %v160
    %v206 = vunpack.c.l.b16 %v161
    %v207 = vunpack.c.l.b16 %v162
    %v208 = vunpack.c.l.b16 %v163
    %v209 = vpack.c.b16 %v194, %v193
    %v210 = vpack.c.b16 %v196, %v195
    %v211 = vpack.c.b16 %v198, %v197
    %v212 = vpack.c.b16 %v200, %v199
    %v213 = vpack.c.b16 %v202, %v201
    %v214 = vpack.c.b16 %v204, %v203
    %v215 = vpack.c.b16 %v206, %v205
    %v216 = vpack.c.b16 %v208, %v207
    %225 = vmatprep.subr.bf16.mxu0 0
    %226 = vmatpush1.bf16.msra.mxu0 %v216
    %227 = vmatprep.subr.bf16.mxu0 0
    %228 = vmatpush1.bf16.msra.mxu0 %v215
    %229 = vmatprep.subr.bf16.mxu0 0
    %230 = vmatpush1.bf16.msra.mxu0 %v214
    %231 = vmatprep.subr.bf16.mxu0 0
    %232 = vmatpush1.bf16.msra.mxu0 %v213
    %233 = vmatprep.subr.bf16.mxu0 0
    %234 = vmatpush1.bf16.msra.mxu0 %v212
    %235 = vmatprep.subr.bf16.mxu0 0
    %236 = vmatpush1.bf16.msra.mxu0 %v211
    %237 = vmatprep.subr.bf16.mxu0 0
    %238 = vmatpush1.bf16.msra.mxu0 %v210
    %239 = vmatprep.subr.bf16.mxu0 0
    %240 = vmatpush1.bf16.msra.mxu0 %v209
    %241 = vmatprep.subr.bf16.mxu0 0
    %242 = vmatpush2.bf16.msra.mxu0 0
    %243 = vmatprep.subr.bf16.mxu0 0
    %244 = vmatpush2.bf16.msra.mxu0 0
    %245 = vmatprep.subr.bf16.mxu0 0
    %246 = vmatpush2.bf16.msra.mxu0 0
    %247 = vmatprep.subr.bf16.mxu0 0
    %248 = vmatpush2.bf16.msra.mxu0 0
    %249 = vmatprep.subr.bf16.mxu0 0
    %250 = vmatpush2.bf16.msra.mxu0 0
    %251 = vmatprep.subr.bf16.mxu0 0
    %252 = vmatpush2.bf16.msra.mxu0 0
    %253 = vmatprep.subr.bf16.mxu0 0
    %254 = vmatpush2.bf16.msra.mxu0 0
    %255 = vmatprep.subr.bf16.mxu0 0
    %256 = vmatpush2.bf16.msra.mxu0 0
    %257 = vmatprep.mubr.bf16.mxu0 0
    %258 = vmatmul.mubr.bf16.gmra.mxu0 %v175
    %v259 = vpop.f32.mrf.mxu0
    %v260 = vadd.f32 %v169, %v259
    %v261 = vpop.f32.mrf.mxu0
    %v262 = vpop.f32.mrf.mxu0
    %v263 = vadd.f32 %v169, %v262
    %v264 = vpop.f32.mrf.mxu0
    %265 = vdwg.mxu0
    %vm266 = vcmp.gt.f32.partialorder %v260, 0.0
    %vm267 = vcmp.gt.f32.partialorder %v263, 0.0
    %v268 = vmin.f32 %v260, 0.0
    %v269 = vmin.f32 %v263, 0.0
    %v270 = vmul.f32 %v268, 1.442695
    %v271 = vpow.pop %v270
    %v272 = vmul.f32 %v269, 1.442695
    %v273 = vpow.pop %v272
    %v274 = vsub.f32 %v271, 1.0
    %v275 = vsub.f32 %v273, 1.0
    %v276 = vsel %vm266, %v260, %v274
    %v277 = vsel %vm267, %v263, %v275
    %v278 = vpack.c.bf16 %v277, %v276
    %v279 = vld [vmem:[#allocation9] sm:$0xf]
    %v280 = vld [vmem:[#allocation9 + $0x4] sm:$0xf]
    %v281 = vld [vmem:[#allocation9 + $0x8] sm:$0xf]
    %v282 = vld [vmem:[#allocation9 + $0xc] sm:$0xf]
    %v283 = vld [vmem:[#allocation9 + $0x10] sm:$0xf]
    %v284 = vld [vmem:[#allocation9 + $0x14] sm:$0xf]
    %v285 = vld [vmem:[#allocation9 + $0x18] sm:$0xf]
    %v286 = vld [vmem:[#allocation9 + $0x1c] sm:$0xf]
    %v287 = vld [vmem:[#allocation9 + $0x20] sm:$0xf]
    %v288 = vld [vmem:[#allocation9 + $0x24] sm:$0xf]
    %v289 = vld [vmem:[#allocation9 + $0x28] sm:$0xf]
    %v290 = vld [vmem:[#allocation9 + $0x2c] sm:$0xf]
    %v291 = vld [vmem:[#allocation9 + $0x30] sm:$0xf]
    %v292 = vld [vmem:[#allocation9 + $0x34] sm:$0xf]
    %v293 = vld [vmem:[#allocation9 + $0x38] sm:$0xf]
    %v294 = vld [vmem:[#allocation9 + $0x3c] sm:$0xf]
    %v295 = vld [vmem:[%s5] sm:$0x1]
    %v297 = vlaneseq
    %v298 = vshrl.u32 %v297, 7
    %v299 = vsub.s32 0, %v298
    %v300 = vrot.slane %v295, %v299
    %v318 = vunpack.c.l.b16 %v279
    %v319 = vunpack.c.l.b16 %v280
    %v320 = vunpack.c.l.b16 %v281
    %v321 = vunpack.c.l.b16 %v282
    %v322 = vunpack.c.l.b16 %v283
    %v323 = vunpack.c.l.b16 %v284
    %v324 = vunpack.c.l.b16 %v285
    %v325 = vunpack.c.l.b16 %v286
    %v326 = vunpack.c.l.b16 %v287
    %v327 = vunpack.c.l.b16 %v288
    %v328 = vunpack.c.l.b16 %v289
    %v329 = vunpack.c.l.b16 %v290
    %v330 = vunpack.c.l.b16 %v291
    %v331 = vunpack.c.l.b16 %v292
    %v332 = vunpack.c.l.b16 %v293
    %v333 = vunpack.c.l.b16 %v294
    %v334 = vpack.c.b16 %v319, %v318
    %v335 = vpack.c.b16 %v321, %v320
    %v336 = vpack.c.b16 %v323, %v322
    %v337 = vpack.c.b16 %v325, %v324
    %v338 = vpack.c.b16 %v327, %v326
    %v339 = vpack.c.b16 %v329, %v328
    %v340 = vpack.c.b16 %v331, %v330
    %v341 = vpack.c.b16 %v333, %v332
    %350 = vmatprep.subr.bf16.mxu0 0
    %351 = vmatpush1.bf16.msra.mxu0 %v341
    %352 = vmatprep.subr.bf16.mxu0 0
    %353 = vmatpush1.bf16.msra.mxu0 %v340
    %354 = vmatprep.subr.bf16.mxu0 0
    %355 = vmatpush1.bf16.msra.mxu0 %v339
    %356 = vmatprep.subr.bf16.mxu0 0
    %357 = vmatpush1.bf16.msra.mxu0 %v338
    %358 = vmatprep.subr.bf16.mxu0 0
    %359 = vmatpush1.bf16.msra.mxu0 %v337
    %360 = vmatprep.subr.bf16.mxu0 0
    %361 = vmatpush1.bf16.msra.mxu0 %v336
    %362 = vmatprep.subr.bf16.mxu0 0
    %363 = vmatpush1.bf16.msra.mxu0 %v335
    %364 = vmatprep.subr.bf16.mxu0 0
    %365 = vmatpush1.bf16.msra.mxu0 %v334
    %366 = vmatprep.subr.bf16.mxu0 0
    %367 = vmatpush2.bf16.msra.mxu0 0
    %368 = vmatprep.subr.bf16.mxu0 0
    %369 = vmatpush2.bf16.msra.mxu0 0
    %370 = vmatprep.subr.bf16.mxu0 0
    %371 = vmatpush2.bf16.msra.mxu0 0
    %372 = vmatprep.subr.bf16.mxu0 0
    %373 = vmatpush2.bf16.msra.mxu0 0
    %374 = vmatprep.subr.bf16.mxu0 0
    %375 = vmatpush2.bf16.msra.mxu0 0
    %376 = vmatprep.subr.bf16.mxu0 0
    %377 = vmatpush2.bf16.msra.mxu0 0
    %378 = vmatprep.subr.bf16.mxu0 0
    %379 = vmatpush2.bf16.msra.mxu0 0
    %380 = vmatprep.subr.bf16.mxu0 0
    %381 = vmatpush2.bf16.msra.mxu0 0
    %382 = vmatprep.mubr.bf16.mxu0 0
    %383 = vmatmul.mubr.bf16.gmra.mxu0 %v278
    %v384 = vpop.f32.mrf.mxu0
    %v385 = vadd.f32 %v300, %v384
    %v386 = vpop.f32.mrf.mxu0
    %v387 = vpop.f32.mrf.mxu0
    %v388 = vadd.f32 %v300, %v387
    %v389 = vpop.f32.mrf.mxu0
    %390 = vdwg.mxu0
    %vm391 = vcmp.gt.f32.partialorder %v385, 0.0
    %vm392 = vcmp.gt.f32.partialorder %v388, 0.0
    %v393 = vmin.f32 %v385, 0.0
    %v394 = vmin.f32 %v388, 0.0
    %v395 = vmul.f32 %v393, 1.442695
    %v396 = vpow.pop %v395
    %v397 = vmul.f32 %v394, 1.442695
    %v398 = vpow.pop %v397
    %v399 = vsub.f32 %v396, 1.0
    %v400 = vsub.f32 %v398, 1.0
    %v401 = vsel %vm391, %v385, %v399
    %v402 = vsel %vm392, %v388, %v400
    %v403 = vpack.c.bf16 %v402, %v401
    %v404 = vld [vmem:[#allocation14] sm:$0xf]
    %v405 = vld [vmem:[#allocation14 + $0x4] sm:$0xf]
    %v406 = vld [vmem:[#allocation14 + $0x8] sm:$0xf]
    %v407 = vld [vmem:[#allocation14 + $0xc] sm:$0xf]
    %v408 = vld [vmem:[#allocation14 + $0x10] sm:$0xf]
    %v409 = vld [vmem:[#allocation14 + $0x14] sm:$0xf]
    %v410 = vld [vmem:[#allocation14 + $0x18] sm:$0xf]
    %v411 = vld [vmem:[#allocation14 + $0x1c] sm:$0xf]
    %v412 = vld [vmem:[#allocation14 + $0x20] sm:$0xf]
    %v413 = vld [vmem:[#allocation14 + $0x24] sm:$0xf]
    %v414 = vld [vmem:[#allocation14 + $0x28] sm:$0xf]
    %v415 = vld [vmem:[#allocation14 + $0x2c] sm:$0xf]
    %v416 = vld [vmem:[#allocation14 + $0x30] sm:$0xf]
    %v417 = vld [vmem:[#allocation14 + $0x34] sm:$0xf]
    %v418 = vld [vmem:[#allocation14 + $0x38] sm:$0xf]
    %v419 = vld [vmem:[#allocation14 + $0x3c] sm:$0xf]
    %v420 = vld [vmem:[%s11] sm:$0x1]
    %v422 = vlaneseq
    %v423 = vshrl.u32 %v422, 7
    %v424 = vsub.s32 0, %v423
    %v425 = vrot.slane %v420, %v424
    %v443 = vunpack.c.l.b16 %v404
    %v444 = vunpack.c.l.b16 %v405
    %v445 = vunpack.c.l.b16 %v406
    %v446 = vunpack.c.l.b16 %v407
    %v447 = vunpack.c.l.b16 %v408
    %v448 = vunpack.c.l.b16 %v409
    %v449 = vunpack.c.l.b16 %v410
    %v450 = vunpack.c.l.b16 %v411
    %v451 = vunpack.c.l.b16 %v412
    %v452 = vunpack.c.l.b16 %v413
    %v453 = vunpack.c.l.b16 %v414
    %v454 = vunpack.c.l.b16 %v415
    %v455 = vunpack.c.l.b16 %v416
    %v456 = vunpack.c.l.b16 %v417
    %v457 = vunpack.c.l.b16 %v418
    %v458 = vunpack.c.l.b16 %v419
    %v459 = vpack.c.b16 %v444, %v443
    %v460 = vpack.c.b16 %v446, %v445
    %v461 = vpack.c.b16 %v448, %v447
    %v462 = vpack.c.b16 %v450, %v449
    %v463 = vpack.c.b16 %v452, %v451
    %v464 = vpack.c.b16 %v454, %v453
    %v465 = vpack.c.b16 %v456, %v455
    %v466 = vpack.c.b16 %v458, %v457
    %475 = vmatprep.subr.bf16.mxu0 0
    %476 = vmatpush1.bf16.msra.mxu0 %v466
    %477 = vmatprep.subr.bf16.mxu0 0
    %478 = vmatpush1.bf16.msra.mxu0 %v465
    %479 = vmatprep.subr.bf16.mxu0 0
    %480 = vmatpush1.bf16.msra.mxu0 %v464
    %481 = vmatprep.subr.bf16.mxu0 0
    %482 = vmatpush1.bf16.msra.mxu0 %v463
    %483 = vmatprep.subr.bf16.mxu0 0
    %484 = vmatpush1.bf16.msra.mxu0 %v462
    %485 = vmatprep.subr.bf16.mxu0 0
    %486 = vmatpush1.bf16.msra.mxu0 %v461
    %487 = vmatprep.subr.bf16.mxu0 0
    %488 = vmatpush1.bf16.msra.mxu0 %v460
    %489 = vmatprep.subr.bf16.mxu0 0
    %490 = vmatpush1.bf16.msra.mxu0 %v459
    %491 = vmatprep.subr.bf16.mxu0 0
    %492 = vmatpush2.bf16.msra.mxu0 0
    %493 = vmatprep.subr.bf16.mxu0 0
    %494 = vmatpush2.bf16.msra.mxu0 0
    %495 = vmatprep.subr.bf16.mxu0 0
    %496 = vmatpush2.bf16.msra.mxu0 0
    %497 = vmatprep.subr.bf16.mxu0 0
    %498 = vmatpush2.bf16.msra.mxu0 0
    %499 = vmatprep.subr.bf16.mxu0 0
    %500 = vmatpush2.bf16.msra.mxu0 0
    %501 = vmatprep.subr.bf16.mxu0 0
    %502 = vmatpush2.bf16.msra.mxu0 0
    %503 = vmatprep.subr.bf16.mxu0 0
    %504 = vmatpush2.bf16.msra.mxu0 0
    %505 = vmatprep.subr.bf16.mxu0 0
    %506 = vmatpush2.bf16.msra.mxu0 0
    %507 = vmatprep.mubr.bf16.mxu0 0
    %508 = vmatmul.mubr.bf16.gmra.mxu0 %v403
    %v509 = vpop.f32.mrf.mxu0
    %v510 = vadd.f32 %v425, %v509
    %v511 = vpop.f32.mrf.mxu0
    %v512 = vpop.f32.mrf.mxu0
    %v513 = vadd.f32 %v425, %v512
    %v514 = vpop.f32.mrf.mxu0
    %515 = vdwg.mxu0
    %516 = vst [vmem:[#allocation15] sm:$0xff] %v510
    %517 = vst [vmem:[#allocation15 + $0x10] sm:$0xff] %v513
    %v518 = vld [vmem:[#allocation6] sm:$0xf]
    %v519 = vld [vmem:[#allocation6 + $0x4] sm:$0xf]
    %v520 = vld [vmem:[#allocation11] sm:$0xf]
    %v521 = vld [vmem:[#allocation11 + $0x4] sm:$0xf]
    %v522 = vld [vmem:[#allocation11 + $0x8] sm:$0xf]
    %v523 = vld [vmem:[#allocation11 + $0xc] sm:$0xf]
    %v524 = vld [vmem:[#allocation11 + $0x10] sm:$0xf]
    %v525 = vld [vmem:[#allocation11 + $0x14] sm:$0xf]
    %v526 = vld [vmem:[#allocation11 + $0x18] sm:$0xf]
    %v527 = vld [vmem:[#allocation11 + $0x1c] sm:$0xf]
    %v528 = vld [vmem:[#allocation11 + $0x20] sm:$0xf]
    %v529 = vld [vmem:[#allocation11 + $0x24] sm:$0xf]
    %v530 = vld [vmem:[#allocation11 + $0x28] sm:$0xf]
    %v531 = vld [vmem:[#allocation11 + $0x2c] sm:$0xf]
    %v532 = vld [vmem:[#allocation11 + $0x30] sm:$0xf]
    %v533 = vld [vmem:[#allocation11 + $0x34] sm:$0xf]
    %v534 = vld [vmem:[#allocation11 + $0x38] sm:$0xf]
    %v535 = vld [vmem:[#allocation11 + $0x3c] sm:$0xf]
    %v536 = vld [vmem:[%s7] sm:$0x1]
    %v538 = vlaneseq
    %v539 = vshrl.u32 %v538, 7
    %v540 = vsub.s32 0, %v539
    %v541 = vrot.slane %v536, %v540
    %v545 = vunpack.c.l.b16 %v518
    %v546 = vunpack.c.l.b16 %v519
    %v547 = vpack.c.b16 %v546, %v545
    %v565 = vunpack.c.l.b16 %v520
    %v566 = vunpack.c.l.b16 %v521
    %v567 = vunpack.c.l.b16 %v522
    %v568 = vunpack.c.l.b16 %v523
    %v569 = vunpack.c.l.b16 %v524
    %v570 = vunpack.c.l.b16 %v525
    %v571 = vunpack.c.l.b16 %v526
    %v572 = vunpack.c.l.b16 %v527
    %v573 = vunpack.c.l.b16 %v528
    %v574 = vunpack.c.l.b16 %v529
    %v575 = vunpack.c.l.b16 %v530
    %v576 = vunpack.c.l.b16 %v531
    %v577 = vunpack.c.l.b16 %v532
    %v578 = vunpack.c.l.b16 %v533
    %v579 = vunpack.c.l.b16 %v534
    %v580 = vunpack.c.l.b16 %v535
    %v581 = vpack.c.b16 %v566, %v565
    %v582 = vpack.c.b16 %v568, %v567
    %v583 = vpack.c.b16 %v570, %v569
    %v584 = vpack.c.b16 %v572, %v571
    %v585 = vpack.c.b16 %v574, %v573
    %v586 = vpack.c.b16 %v576, %v575
    %v587 = vpack.c.b16 %v578, %v577
    %v588 = vpack.c.b16 %v580, %v579
    %597 = vmatprep.subr.bf16.mxu0 0
    %598 = vmatpush1.bf16.msra.mxu0 %v588
    %599 = vmatprep.subr.bf16.mxu0 0
    %600 = vmatpush1.bf16.msra.mxu0 %v587
    %601 = vmatprep.subr.bf16.mxu0 0
    %602 = vmatpush1.bf16.msra.mxu0 %v586
    %603 = vmatprep.subr.bf16.mxu0 0
    %604 = vmatpush1.bf16.msra.mxu0 %v585
    %605 = vmatprep.subr.bf16.mxu0 0
    %606 = vmatpush1.bf16.msra.mxu0 %v584
    %607 = vmatprep.subr.bf16.mxu0 0
    %608 = vmatpush1.bf16.msra.mxu0 %v583
    %609 = vmatprep.subr.bf16.mxu0 0
    %610 = vmatpush1.bf16.msra.mxu0 %v582
    %611 = vmatprep.subr.bf16.mxu0 0
    %612 = vmatpush1.bf16.msra.mxu0 %v581
    %613 = vmatprep.subr.bf16.mxu0 0
    %614 = vmatpush2.bf16.msra.mxu0 0
    %615 = vmatprep.subr.bf16.mxu0 0
    %616 = vmatpush2.bf16.msra.mxu0 0
    %617 = vmatprep.subr.bf16.mxu0 0
    %618 = vmatpush2.bf16.msra.mxu0 0
    %619 = vmatprep.subr.bf16.mxu0 0
    %620 = vmatpush2.bf16.msra.mxu0 0
    %621 = vmatprep.subr.bf16.mxu0 0
    %622 = vmatpush2.bf16.msra.mxu0 0
    %623 = vmatprep.subr.bf16.mxu0 0
    %624 = vmatpush2.bf16.msra.mxu0 0
    %625 = vmatprep.subr.bf16.mxu0 0
    %626 = vmatpush2.bf16.msra.mxu0 0
    %627 = vmatprep.subr.bf16.mxu0 0
    %628 = vmatpush2.bf16.msra.mxu0 0
    %629 = vmatprep.mubr.bf16.mxu0 0
    %630 = vmatmul.mubr.bf16.gmra.mxu0 %v547
    %v631 = vpop.f32.mrf.mxu0
    %v632 = vadd.f32 %v541, %v631
    %v633 = vpop.f32.mrf.mxu0
    %v634 = vpop.f32.mrf.mxu0
    %v635 = vadd.f32 %v541, %v634
    %v636 = vpop.f32.mrf.mxu0
    %637 = vdwg.mxu0
    %vm638 = vcmp.gt.f32.partialorder %v632, 0.0
    %vm639 = vcmp.gt.f32.partialorder %v635, 0.0
    %v640 = vmin.f32 %v632, 0.0
    %v641 = vmin.f32 %v635, 0.0
    %v642 = vmul.f32 %v640, 1.442695
    %v643 = vpow.pop %v642
    %v644 = vmul.f32 %v641, 1.442695
    %v645 = vpow.pop %v644
    %v646 = vsub.f32 %v643, 1.0
    %v647 = vsub.f32 %v645, 1.0
    %v648 = vsel %vm638, %v632, %v646
    %v649 = vsel %vm639, %v635, %v647
    %v650 = vpack.c.bf16 %v649, %v648
    %v651 = vld [vmem:[#allocation12] sm:$0xf]
    %v652 = vld [vmem:[#allocation12 + $0x4] sm:$0xf]
    %v653 = vld [vmem:[#allocation12 + $0x8] sm:$0xf]
    %v654 = vld [vmem:[#allocation12 + $0xc] sm:$0xf]
    %v655 = vld [vmem:[#allocation12 + $0x10] sm:$0xf]
    %v656 = vld [vmem:[#allocation12 + $0x14] sm:$0xf]
    %v657 = vld [vmem:[#allocation12 + $0x18] sm:$0xf]
    %v658 = vld [vmem:[#allocation12 + $0x1c] sm:$0xf]
    %v659 = vld [vmem:[#allocation12 + $0x20] sm:$0xf]
    %v660 = vld [vmem:[#allocation12 + $0x24] sm:$0xf]
    %v661 = vld [vmem:[#allocation12 + $0x28] sm:$0xf]
    %v662 = vld [vmem:[#allocation12 + $0x2c] sm:$0xf]
    %v663 = vld [vmem:[#allocation12 + $0x30] sm:$0xf]
    %v664 = vld [vmem:[#allocation12 + $0x34] sm:$0xf]
    %v665 = vld [vmem:[#allocation12 + $0x38] sm:$0xf]
    %v666 = vld [vmem:[#allocation12 + $0x3c] sm:$0xf]
    %v667 = vld [vmem:[%s9] sm:$0x1]
    %v669 = vlaneseq
    %v670 = vshrl.u32 %v669, 7
    %v671 = vsub.s32 0, %v670
    %v672 = vrot.slane %v667, %v671
    %v690 = vunpack.c.l.b16 %v651
    %v691 = vunpack.c.l.b16 %v652
    %v692 = vunpack.c.l.b16 %v653
    %v693 = vunpack.c.l.b16 %v654
    %v694 = vunpack.c.l.b16 %v655
    %v695 = vunpack.c.l.b16 %v656
    %v696 = vunpack.c.l.b16 %v657
    %v697 = vunpack.c.l.b16 %v658
    %v698 = vunpack.c.l.b16 %v659
    %v699 = vunpack.c.l.b16 %v660
    %v700 = vunpack.c.l.b16 %v661
    %v701 = vunpack.c.l.b16 %v662
    %v702 = vunpack.c.l.b16 %v663
    %v703 = vunpack.c.l.b16 %v664
    %v704 = vunpack.c.l.b16 %v665
    %v705 = vunpack.c.l.b16 %v666
    %v706 = vpack.c.b16 %v691, %v690
    %v707 = vpack.c.b16 %v693, %v692
    %v708 = vpack.c.b16 %v695, %v694
    %v709 = vpack.c.b16 %v697, %v696
    %v710 = vpack.c.b16 %v699, %v698
    %v711 = vpack.c.b16 %v701, %v700
    %v712 = vpack.c.b16 %v703, %v702
    %v713 = vpack.c.b16 %v705, %v704
    %722 = vmatprep.subr.bf16.mxu0 0
    %723 = vmatpush1.bf16.msra.mxu0 %v713
    %724 = vmatprep.subr.bf16.mxu0 0
    %725 = vmatpush1.bf16.msra.mxu0 %v712
    %726 = vmatprep.subr.bf16.mxu0 0
    %727 = vmatpush1.bf16.msra.mxu0 %v711
    %728 = vmatprep.subr.bf16.mxu0 0
    %729 = vmatpush1.bf16.msra.mxu0 %v710
    %730 = vmatprep.subr.bf16.mxu0 0
    %731 = vmatpush1.bf16.msra.mxu0 %v709
    %732 = vmatprep.subr.bf16.mxu0 0
    %733 = vmatpush1.bf16.msra.mxu0 %v708
    %734 = vmatprep.subr.bf16.mxu0 0
    %735 = vmatpush1.bf16.msra.mxu0 %v707
    %736 = vmatprep.subr.bf16.mxu0 0
    %737 = vmatpush1.bf16.msra.mxu0 %v706
    %738 = vmatprep.subr.bf16.mxu0 0
    %739 = vmatpush2.bf16.msra.mxu0 0
    %740 = vmatprep.subr.bf16.mxu0 0
    %741 = vmatpush2.bf16.msra.mxu0 0
    %742 = vmatprep.subr.bf16.mxu0 0
    %743 = vmatpush2.bf16.msra.mxu0 0
    %744 = vmatprep.subr.bf16.mxu0 0
    %745 = vmatpush2.bf16.msra.mxu0 0
    %746 = vmatprep.subr.bf16.mxu0 0
    %747 = vmatpush2.bf16.msra.mxu0 0
    %748 = vmatprep.subr.bf16.mxu0 0
    %749 = vmatpush2.bf16.msra.mxu0 0
    %750 = vmatprep.subr.bf16.mxu0 0
    %751 = vmatpush2.bf16.msra.mxu0 0
    %752 = vmatprep.subr.bf16.mxu0 0
    %753 = vmatpush2.bf16.msra.mxu0 0
    %754 = vmatprep.mubr.bf16.mxu0 0
    %755 = vmatmul.mubr.bf16.gmra.mxu0 %v650
    %v756 = vpop.f32.mrf.mxu0
    %v757 = vadd.f32 %v672, %v756
    %v758 = vpop.f32.mrf.mxu0
    %v759 = vpop.f32.mrf.mxu0
    %v760 = vadd.f32 %v672, %v759
    %v761 = vpop.f32.mrf.mxu0
    %762 = vdwg.mxu0
    %vm763 = vcmp.gt.f32.partialorder %v757, 0.0
    %vm764 = vcmp.gt.f32.partialorder %v760, 0.0
    %v765 = vmin.f32 %v757, 0.0
    %v766 = vmin.f32 %v760, 0.0
    %v767 = vmul.f32 %v765, 1.442695
    %v768 = vpow.pop %v767
    %v769 = vmul.f32 %v766, 1.442695
    %v770 = vpow.pop %v769
    %v771 = vsub.f32 %v768, 1.0
    %v772 = vsub.f32 %v770, 1.0
    %v773 = vsel %vm763, %v757, %v771
    %v774 = vsel %vm764, %v760, %v772
    %v775 = vpack.c.bf16 %v774, %v773
    %v776 = vunpack.c.l.bf16 %v775
    %v777 = vunpack.c.h.bf16 %v775
    %v778 = vld [vmem:[%s12] sm:$0x1]
    %v780 = vlaneseq
    %v781 = vshrl.u32 %v780, 7
    %v782 = vsub.s32 0, %v781
    %v783 = vrot.slane %v778, %v782
    %v785 = vmul.f32 %v776, %v783
    %v786 = vmul.f32 %v777, %v783
    %787 = vadd.xlane.f32.xlu0 %v785
    %v788 = vpop.xlane.xlu0 %787
    %789 = vadd.xlane.f32.xlu0 %v786
    %v790 = vpop.xlane.xlu0 %789
    %v791 = vld [vmem:[#allocation2] sm:$0x1]
    %v793 = vlaneseq
    %v794 = vshrl.u32 %v793, 7
    %v795 = vsub.s32 0, %v794
    %v796 = vrot.slane %v791, %v795
    %v798 = vadd.f32 %v788, %v796
    %v799 = vadd.f32 %v790, %v796
    %v800 = vlaneseq
    %v801 = vand.u32 %v800, 127
    %vm802 = vcmp.eq.s32.totalorder %v801, 0
    %804 = vset.pattern.permute.xlu0 0
    %805 = vperm.xlu0 %804, %v798
    %v806 = vpop.permute.xlu0 %805
    %809 = vset.pattern.permute.xlu0 0
    %810 = vperm.xlu0 %809, %v799
    %v811 = vpop.permute.xlu0 %810
    %v813 = vsel %vm802, %v806, 0.0
    %v814 = vsel %vm802, %v811, 0.0
    %815 = vst [vmem:[#allocation15 + $0x8] sm:$0xff] %v813
    %816 = vst [vmem:[#allocation15 + $0x18] sm:$0xff] %v814
    // Predicated region
    $region86: #{tpu_custom_call.1} parent=1 // pred_check
      _
    $region87: #{tpu_custom_call.1} parent=1 // pred_check_branch
      %818 = sbr.rel (0) target = $region89
    $region88: #{tpu_custom_call.1} parent=1 // pred_region
      %s820 = ssub.s32 512, 512
      %821 = vsyncadd [#allocation5], %s820
      %s822 = sshll.u32 [#allocation15], 4
      %s823 = int_to_ptr.vmem [resolvable:$true] %s822
      %828 = dma.vmem_to_hbm [thread:$0]  %s823, 512, %s14, [#allocation5], 256, 256, 16
    $region89: #{tpu_custom_call.1} parent=1 // pred_fallthru
      _
    // Predicated region
    $region90: #{tpu_custom_call.1} parent=1 // pred_check
      _
    $region91: #{tpu_custom_call.1} parent=1 // pred_check_branch
      %830 = sbr.rel (0) target = $region93
    $region92: #{tpu_custom_call.1} parent=1 // pred_region
      %831 = dma.done [#allocation5], 512
    $region93: #{tpu_custom_call.1} parent=1 // pred_fallthru
      _
    %832 = vsyncpa [#allocation4], 1
    %833 = vsyncpa [#allocation7], 1
    %834 = vsyncpa [#allocation10], 1
    %835 = vsyncpa [#allocation13], 1
    %836 = vsyncpa [#allocation5], 1

</llo_original>
